<compile_context>
chip_gen: v7x
topology: tpu7x:2x2x1
jax: 0.10.0
libtpu: 0.0.40
codegen_flags: <defaults>
</compile_context>

<pallas_src>
import functools

import numpy as np
import jax
import jax.numpy as jnp
from jax.experimental import pallas as pl
from jax.experimental.pallas import tpu as pltpu


def _round_up(x, m):
    return -(-x // m) * m


def ren_kernel(ut_ref, bw_ref, bs_ref, bsdg_ref, wout_ref, yt_ref,
               pend_sc, su_sc, *, hp, ko, ki, cdt):
    """
    ut_ref   : [Ip, TB]        u^T batch tile (batch on lanes), compute dtype
    bw_ref   : [Hp, Ip]        B weight, compute dtype
    bs_ref   : [Hp, Hp]        Bs, strictly lower triangular (pre-masked), compute dtype
    bsdg_ref : [nP, KO, KO]    pre-extracted diagonal KOxKO blocks of Bs, f32
    wout_ref : [Op, Hp+Ip]     [Ds | D] fused epilogue weight, compute dtype
    yt_ref   : [Op, TB]        y^T batch tile, f32
    pend_sc  : [KO, TB] f32    pre-activation rows of the current panel
    su_sc    : [Hp+Ip, TB]     fused [s ; u^T] operand (compute dtype)
    """
    tb = ut_ref.shape[1]
    ip = ut_ref.shape[0]
    num_panels = -(-hp // ko)

    ut = ut_ref[...]
    # u^T forms the tail of the fused [s ; u^T] epilogue operand.
    su_sc[hp:hp + ip, :] = ut

    # NOTE: no full zero-init of su_sc — every s row is written below before it
    # is read (the off-diagonal dots contract only over already-computed rows).

    # TODO(synk): for very large hp (>= ~64 panels) convert this static unroll
    # into a lax.fori_loop over fixed-size outer panels to bound code size.
    for p in range(num_panels):
        lo = p * ko
        kp = min(ko, hp - lo)

        # (B u)^T rows for this panel — MXU matmul with M = kp.
        base = jnp.dot(bw_ref[lo:lo + kp, :], ut,
                       preferred_element_type=jnp.float32)
        if p > 0:
            # Whole off-diagonal contribution of the panel in ONE big MXU
            # matmul, contracting ONLY over the `lo` already-computed s rows
            # (lo is a static multiple of 128 -> aligned slices).
            base = base + jnp.dot(bs_ref[lo:lo + kp, :lo], su_sc[:lo, :],
                                  preferred_element_type=jnp.float32)
        pend_sc[0:kp, :] = base

        # Within the panel's KOxKO diagonal block: micro blocks of ki rows.
        for q in range(kp // ki):
            qlo = q * ki
            blk = pend_sc[qlo:qlo + ki, :]                       # [ki, TB] f32
            if q > 0:
                # Left-looking in-panel contribution from rows already
                # finished inside this panel (one small MXU matmul).
                blk = blk + jnp.dot(
                    bsdg_ref[p, qlo:qlo + ki, :qlo].astype(cdt),
                    su_sc[lo:lo + qlo, :],
                    preferred_element_type=jnp.float32)

            # ki x ki strictly-lower micro block: serial rank-1 recurrence,
            # kept in f32 on the VPU (mandatory on v5e).
            bs_mi = bsdg_ref[p, qlo:qlo + ki, qlo:qlo + ki]      # [ki, ki] f32
            # Hoist the lane-broadcasts of the columns off the serial chain.
            cols = [jnp.broadcast_to(bs_mi[:, i:i + 1], (ki, tb))
                    for i in range(ki - 1)]
            for i in range(ki - 1):
                s_i = jnp.maximum(blk[i:i + 1, :], 0.0)          # [1, TB]
                blk = blk + cols[i] * s_i                        # rows > i only
            su_sc[lo + qlo:lo + qlo + ki, :] = (
                jnp.maximum(blk, 0.0).astype(su_sc.dtype))

    # Fused epilogue: y^T = [Ds | D] @ [s ; u^T] — one MXU pass, lane-dense store.
    yt_ref[...] = jnp.dot(wout_ref[...], su_sc[...],
                          preferred_element_type=jnp.float32)


def _pad2(x, rows, cols):
    out = jnp.zeros((rows, cols), x.dtype)
    return out.at[:x.shape[0], :x.shape[1]].set(x)


def _device_kind():
    try:
        return jax.devices()[0].device_kind.lower()
    except Exception:
        return ""


def _pick_batch_tile(batch):
    kind = _device_kind()
    if "v6" in kind:
        return 256                 # v6e MXU is 256 wide; 128 MiB VMEM covers it
    if "v7" in kind or "7x" in kind:
        # v7x: only use 256 if >=2 batch tiles remain for its 2 TensorCores.
        return 256 if batch > 256 else 128
    return 128                     # v5e and safe default


def _vmem_tile_bytes(shape, dtype):
    dt = jnp.dtype(dtype)
    sub = 8 * max(1, 4 // dt.itemsize)
    dims = list(shape)
    dims[-1] = _round_up(dims[-1], 128)
    if len(dims) >= 2:
        dims[-2] = _round_up(dims[-2], sub)
    n = 1
    for d in dims:
        n *= d
    return n * dt.itemsize


def explicit_ren(u, B_W, Bs_full, Ds_W, D_W, *, micro=8, batch_tile=None,
                 compute_dtype=jnp.bfloat16):
    """ExplicitREN forward: u [batch, input_dim] -> y [batch, output_dim].

    compute_dtype is the MXU operand dtype (weights and the s / u copies that
    feed jnp.dot).  The serial diagonal recurrence always runs in f32.  Use
    compute_dtype=jnp.float32 for results matching the f32 reference tightly.
    """
    u = jnp.asarray(u, jnp.float32)
    B_W = jnp.asarray(B_W, jnp.float32)
    Bs_full = jnp.asarray(Bs_full, jnp.float32)
    Ds_W = jnp.asarray(Ds_W, jnp.float32)
    D_W = jnp.asarray(D_W, jnp.float32)

    batch, in_dim = u.shape
    hidden = Bs_full.shape[0]
    out_dim = Ds_W.shape[0]
    cdt = jnp.dtype(compute_dtype)

    if batch_tile is None:
        batch_tile = _pick_batch_tile(batch)

    ki = micro                               # serial rank-1 micro block
    Hp = _round_up(hidden, ki)
    KO = min(128, Hp)                        # outer MXU panel size
    num_panels = -(-Hp // KO)
    Ip = _round_up(in_dim, 8)
    Op = _round_up(out_dim, 8)
    Bp = _round_up(batch, batch_tile)

    # Strictly-lower-triangular mask applied ONCE outside the kernel.
    Bs = Bs_full * jnp.tril(jnp.ones_like(Bs_full), k=-1)
    Bsp32 = _pad2(Bs, Hp, Hp)

    # Pre-extracted, lane-aligned diagonal KOxKO blocks (f32 for the VPU path).
    diag = []
    for p in range(num_panels):
        lo = p * KO
        kp = min(KO, Hp - lo)
        blk = jnp.zeros((KO, KO), jnp.float32)
        blk = blk.at[:kp, :kp].set(Bsp32[lo:lo + kp, lo:lo + kp])
        diag.append(blk)
    Bs_diag = jnp.stack(diag)                # [num_panels, KO, KO] f32

    # MXU operands in compute dtype (bf16 by default).
    ut = _pad2(u.T, Ip, Bp).astype(cdt)                      # [Ip, Bp]
    B_Wp = _pad2(B_W, Hp, Ip).astype(cdt)                    # [Hp, Ip]
    Bsp = Bsp32.astype(cdt)                                  # [Hp, Hp]
    Wout = jnp.concatenate(                                  # [Op, Hp+Ip]
        [_pad2(Ds_W, Op, Hp), _pad2(D_W, Op, Ip)], axis=1).astype(cdt)

    kernel = functools.partial(ren_kernel, hp=Hp, ko=KO, ki=ki, cdt=cdt)
    grid = (Bp // batch_tile,)

    # Generation-aware VMEM budget: size to actual need; cap ~40 MiB on v7x
    # (64 MiB/TC physical), ~96 MiB on v5e/v6e (128 MiB physical).
    w_bytes = (_vmem_tile_bytes((Hp, Ip), cdt)
               + _vmem_tile_bytes((Hp, Hp), cdt)
               + _vmem_tile_bytes((num_panels, KO, KO), jnp.float32)
               + _vmem_tile_bytes((Op, Hp + Ip), cdt))
    io_bytes = 2 * (_vmem_tile_bytes((Ip, batch_tile), cdt)
                    + _vmem_tile_bytes((Op, batch_tile), jnp.float32))
    sc_bytes = (_vmem_tile_bytes((KO, batch_tile), jnp.float32)
                + _vmem_tile_bytes((Hp + Ip, batch_tile), cdt))
    need_single = w_bytes + io_bytes + sc_bytes
    need_double = 2 * w_bytes + io_bytes + sc_bytes
    kind = _device_kind()
    cap = (40 << 20) if ("v7" in kind or "7x" in kind) else (96 << 20)
    vmem_limit = int(min(cap, max(32 << 20, need_double + (8 << 20))))
    vmem_limit = int(max(vmem_limit, need_single + (4 << 20)))
    # TODO(synk): once Bs itself (Hp^2 * itemsize) stops fitting v7x's 64 MiB
    # VMEM, stream it in row panels via an extra grid axis / pltpu.emit_pipeline.

    def _run(single_buffer_weights):
        def wspec(shape):
            idx = lambda b: (0,) * len(shape)       # grid-invariant weight block
            if single_buffer_weights:
                return pl.BlockSpec(shape, idx, pipeline_mode=pl.Buffered(1))
            return pl.BlockSpec(shape, idx)

        grid_spec = pltpu.PrefetchScalarGridSpec(
            num_scalar_prefetch=0,
            grid=grid,
            in_specs=[
                pl.BlockSpec((Ip, batch_tile), lambda b: (0, b)),   # u^T tile
                wspec((Hp, Ip)),                                    # B
                wspec((Hp, Hp)),                                    # Bs (masked)
                wspec((num_panels, KO, KO)),                        # diag blocks
                wspec((Op, Hp + Ip)),                               # [Ds | D]
            ],
            out_specs=pl.BlockSpec((Op, batch_tile), lambda b: (0, b)),
            scratch_shapes=[
                pltpu.VMEM((KO, batch_tile), jnp.float32),          # panel pending
                pltpu.VMEM((Hp + Ip, batch_tile), cdt),             # [s ; u^T]
            ],
        )
        return pl.pallas_call(
            kernel,
            out_shape=jax.ShapeDtypeStruct((Op, Bp), jnp.float32),
            grid_spec=grid_spec,
            compiler_params=pltpu.CompilerParams(
                dimension_semantics=("parallel",),
                vmem_limit_bytes=vmem_limit,
            ),
        )(ut, B_Wp, Bsp, Bs_diag, Wout)

    try:
        yt = _run(True)
    except Exception:
        # pl.Buffered(1) (single-buffered weights) not supported by this JAX
        # version — fall back to default double-buffering.
        yt = _run(False)

    return yt[:out_dim, :batch].T


def ref_forward(u, B_W, Bs_full, Ds_W, D_W):
    """Pure-numpy reference mirroring the PyTorch forward."""
    u = np.asarray(u, np.float32)
    B_W = np.asarray(B_W, np.float32)
    Bs_full = np.asarray(Bs_full, np.float32)
    Ds_W = np.asarray(Ds_W, np.float32)
    D_W = np.asarray(D_W, np.float32)
    H = Bs_full.shape[0]
    Bs = Bs_full * np.tril(np.ones_like(Bs_full), k=-1)
    Bu = u @ B_W.T
    s = np.zeros((u.shape[0], H), np.float32)
    for i in range(H):
        s[:, i] = np.maximum(s @ Bs[i, :] + Bu[:, i], 0.0)   # relu activation
    return s @ Ds_W.T + u @ D_W.T


if __name__ == "__main__":
    def linear_init(key, out_f, in_f):
        bound = 1.0 / np.sqrt(in_f)
        return jax.random.uniform(key, (out_f, in_f), jnp.float32, -bound, bound)

    def make_case(key, batch, input_dim, hidden_dim, output_dim):
        ks = jax.random.split(key, 5)
        u = jax.random.normal(ks[0], (batch, input_dim), jnp.float32)
        B_W = linear_init(ks[1], hidden_dim, input_dim)
        xav = float(np.sqrt(6.0 / (hidden_dim + hidden_dim)))
        Bs_full = jax.random.uniform(ks[2], (hidden_dim, hidden_dim),
                                     jnp.float32, -xav, xav)
        Ds_W = linear_init(ks[3], output_dim, hidden_dim)
        D_W = linear_init(ks[4], output_dim, input_dim)
        return u, B_W, Bs_full, Ds_W, D_W

    key = jax.random.PRNGKey(0)
    k1, k2 = jax.random.split(key)

    # Case 1: module-sized shapes (batch=8, in=16, hidden=32, out=8).
    args1 = make_case(k1, 8, 16, 32, 8)
    ref1 = ref_forward(*args1)

    # f32 MXU operands: tight check against the f32 reference.
    y_f32 = jax.block_until_ready(explicit_ren(*args1, compute_dtype=jnp.float32))
    np.testing.assert_allclose(np.asarray(y_f32), ref1, rtol=1e-5, atol=1e-5)

    # Default bf16 MXU operands (perf path): relaxed mixed-precision check.
    y_bf16 = jax.block_until_ready(explicit_ren(*args1))
    np.testing.assert_allclose(np.asarray(y_bf16), ref1, rtol=5e-2, atol=5e-2)

    # Case 2: multi-panel hidden dim — exercises the big off-diagonal MXU
    # matmuls and the ragged last panel.
    args2 = make_case(k2, 4, 8, 200, 4)
    ref2 = ref_forward(*args2)
    y2 = jax.block_until_ready(explicit_ren(*args2, compute_dtype=jnp.float32))
    np.testing.assert_allclose(np.asarray(y2), ref2, rtol=5e-4, atol=5e-4)

    print("KERNEL_OK")
</pallas_src>

<mosaic_0001>
module attributes {stable_mosaic.version = 11 : i64} {
  func.func @ren_kernel(%arg0: i32, %arg1: memref<16x128xf32, #tpu.memory_space<vmem>>, %arg2: memref<32x16xf32, #tpu.memory_space<vmem>>, %arg3: memref<32x32xf32, #tpu.memory_space<vmem>>, %arg4: memref<1x32x32xf32, #tpu.memory_space<vmem>>, %arg5: memref<8x48xf32, #tpu.memory_space<vmem>>, %arg6: memref<8x128xf32, #tpu.memory_space<vmem>>, %arg7: memref<32x128xf32, #tpu.memory_space<vmem>>, %arg8: memref<48x128xf32, #tpu.memory_space<vmem>>) attributes {dimension_semantics = [#tpu.dimension_semantics<parallel>], iteration_bounds = array<i64: 1>, scalar_prefetch = 0 : i64, scratch_operands = 2 : i64, tpu.core_type = #tpu.core_type<tc>, window_params = [{transform_indices = @transform_0, window_bounds = array<i64: 16, 128>}, {pipeline_mode = #tpu.pipeline_mode<synchronous>, transform_indices = @transform_1, window_bounds = array<i64: 32, 16>}, {pipeline_mode = #tpu.pipeline_mode<synchronous>, transform_indices = @transform_2, window_bounds = array<i64: 32, 32>}, {pipeline_mode = #tpu.pipeline_mode<synchronous>, transform_indices = @transform_3, window_bounds = array<i64: 1, 32, 32>}, {pipeline_mode = #tpu.pipeline_mode<synchronous>, transform_indices = @transform_4, window_bounds = array<i64: 8, 48>}, {transform_indices = @transform_5, window_bounds = array<i64: 8, 128>}]} {
    %c0 = arith.constant 0 : index
    %c0_0 = arith.constant 0 : index
    %0 = vector.load %arg1[%c0, %c0_0] : memref<16x128xf32, #tpu.memory_space<vmem>>, vector<16x128xf32>
    %c32 = arith.constant 32 : index
    %c0_1 = arith.constant 0 : index
    %1 = vector.load %arg8[%c32, %c0_1] : memref<48x128xf32, #tpu.memory_space<vmem>>, vector<16x128xf32>
    tpu.vector_store %arg8[%c32, %c0_1], %0 {strides = array<i32>} : memref<48x128xf32, #tpu.memory_space<vmem>>, vector<16x128xf32>,
    %c0_2 = arith.constant 0 : index
    %c0_3 = arith.constant 0 : index
    %2 = vector.load %arg2[%c0_2, %c0_3] : memref<32x16xf32, #tpu.memory_space<vmem>>, vector<32x16xf32>
    %cst = arith.constant dense<0.000000e+00> : vector<32x128xf32>
    %3 = tpu.matmul %2, %0, %cst {dimension_numbers = #tpu.dot_dimension_numbers<[1], [0], [0], [1], [0, 0, 1, 1], [], []>} : vector<32x16xf32>, vector<16x128xf32>, vector<32x128xf32> -> vector<32x128xf32>
    %c0_4 = arith.constant 0 : index
    %c0_5 = arith.constant 0 : index
    %4 = vector.load %arg7[%c0_4, %c0_5] : memref<32x128xf32, #tpu.memory_space<vmem>>, vector<32x128xf32>
    tpu.vector_store %arg7[%c0_4, %c0_5], %3 {strides = array<i32>} : memref<32x128xf32, #tpu.memory_space<vmem>>, vector<32x128xf32>,
    %c0_6 = arith.constant 0 : index
    %c0_7 = arith.constant 0 : index
    %5 = vector.load %arg7[%c0_6, %c0_7] : memref<32x128xf32, #tpu.memory_space<vmem>>, vector<8x128xf32>
    %c0_8 = arith.constant 0 : index
    %c0_9 = arith.constant 0 : index
    %c0_10 = arith.constant 0 : index
    %6 = vector.load %arg4[%c0_8, %c0_9, %c0_10] : memref<1x32x32xf32, #tpu.memory_space<vmem>>, vector<1x8x8xf32>
    %7 = vector.shape_cast %6 : vector<1x8x8xf32> to vector<8x8xf32>
    %8 = vector.extract_strided_slice %7 {offsets = [0, 0], sizes = [8, 1], strides = [1, 1]} : vector<8x8xf32> to vector<8x1xf32>
    %9 = vector.shape_cast %8 : vector<8x1xf32> to vector<8x1xf32>
    %10 = vector.broadcast %9 : vector<8x1xf32> to vector<8x128xf32>
    %11 = vector.extract_strided_slice %7 {offsets = [0, 1], sizes = [8, 1], strides = [1, 1]} : vector<8x8xf32> to vector<8x1xf32>
    %12 = vector.shape_cast %11 : vector<8x1xf32> to vector<8x1xf32>
    %13 = vector.broadcast %12 : vector<8x1xf32> to vector<8x128xf32>
    %14 = vector.extract_strided_slice %7 {offsets = [0, 2], sizes = [8, 1], strides = [1, 1]} : vector<8x8xf32> to vector<8x1xf32>
    %15 = vector.shape_cast %14 : vector<8x1xf32> to vector<8x1xf32>
    %16 = vector.broadcast %15 : vector<8x1xf32> to vector<8x128xf32>
    %17 = vector.extract_strided_slice %7 {offsets = [0, 3], sizes = [8, 1], strides = [1, 1]} : vector<8x8xf32> to vector<8x1xf32>
    %18 = vector.shape_cast %17 : vector<8x1xf32> to vector<8x1xf32>
    %19 = vector.broadcast %18 : vector<8x1xf32> to vector<8x128xf32>
    %20 = vector.extract_strided_slice %7 {offsets = [0, 4], sizes = [8, 1], strides = [1, 1]} : vector<8x8xf32> to vector<8x1xf32>
    %21 = vector.shape_cast %20 : vector<8x1xf32> to vector<8x1xf32>
    %22 = vector.broadcast %21 : vector<8x1xf32> to vector<8x128xf32>
    %23 = vector.extract_strided_slice %7 {offsets = [0, 5], sizes = [8, 1], strides = [1, 1]} : vector<8x8xf32> to vector<8x1xf32>
    %24 = vector.shape_cast %23 : vector<8x1xf32> to vector<8x1xf32>
    %25 = vector.broadcast %24 : vector<8x1xf32> to vector<8x128xf32>
    %26 = vector.extract_strided_slice %7 {offsets = [0, 6], sizes = [8, 1], strides = [1, 1]} : vector<8x8xf32> to vector<8x1xf32>
    %27 = vector.shape_cast %26 : vector<8x1xf32> to vector<8x1xf32>
    %28 = vector.broadcast %27 : vector<8x1xf32> to vector<8x128xf32>
    %29 = vector.extract_strided_slice %5 {offsets = [0, 0], sizes = [1, 128], strides = [1, 1]} : vector<8x128xf32> to vector<1x128xf32>
    %cst_11 = arith.constant 0.000000e+00 : f32
    %30 = vector.broadcast %cst_11 : f32 to vector<1x128xf32>
    %31 = arith.maximumf %29, %30 : vector<1x128xf32>
    %32 = vector.broadcast %31 : vector<1x128xf32> to vector<8x128xf32>
    %33 = arith.mulf %10, %32 : vector<8x128xf32>
    %34 = arith.addf %5, %33 : vector<8x128xf32>
    %35 = vector.extract_strided_slice %34 {offsets = [1, 0], sizes = [1, 128], strides = [1, 1]} : vector<8x128xf32> to vector<1x128xf32>
    %cst_12 = arith.constant 0.000000e+00 : f32
    %36 = vector.broadcast %cst_12 : f32 to vector<1x128xf32>
    %37 = arith.maximumf %35, %36 : vector<1x128xf32>
    %38 = vector.broadcast %37 : vector<1x128xf32> to vector<8x128xf32>
    %39 = arith.mulf %13, %38 : vector<8x128xf32>
    %40 = arith.addf %34, %39 : vector<8x128xf32>
    %41 = vector.extract_strided_slice %40 {offsets = [2, 0], sizes = [1, 128], strides = [1, 1]} : vector<8x128xf32> to vector<1x128xf32>
    %cst_13 = arith.constant 0.000000e+00 : f32
    %42 = vector.broadcast %cst_13 : f32 to vector<1x128xf32>
    %43 = arith.maximumf %41, %42 : vector<1x128xf32>
    %44 = vector.broadcast %43 : vector<1x128xf32> to vector<8x128xf32>
    %45 = arith.mulf %16, %44 : vector<8x128xf32>
    %46 = arith.addf %40, %45 : vector<8x128xf32>
    %47 = vector.extract_strided_slice %46 {offsets = [3, 0], sizes = [1, 128], strides = [1, 1]} : vector<8x128xf32> to vector<1x128xf32>
    %cst_14 = arith.constant 0.000000e+00 : f32
    %48 = vector.broadcast %cst_14 : f32 to vector<1x128xf32>
    %49 = arith.maximumf %47, %48 : vector<1x128xf32>
    %50 = vector.broadcast %49 : vector<1x128xf32> to vector<8x128xf32>
    %51 = arith.mulf %19, %50 : vector<8x128xf32>
    %52 = arith.addf %46, %51 : vector<8x128xf32>
    %53 = vector.extract_strided_slice %52 {offsets = [4, 0], sizes = [1, 128], strides = [1, 1]} : vector<8x128xf32> to vector<1x128xf32>
    %cst_15 = arith.constant 0.000000e+00 : f32
    %54 = vector.broadcast %cst_15 : f32 to vector<1x128xf32>
    %55 = arith.maximumf %53, %54 : vector<1x128xf32>
    %56 = vector.broadcast %55 : vector<1x128xf32> to vector<8x128xf32>
    %57 = arith.mulf %22, %56 : vector<8x128xf32>
    %58 = arith.addf %52, %57 : vector<8x128xf32>
    %59 = vector.extract_strided_slice %58 {offsets = [5, 0], sizes = [1, 128], strides = [1, 1]} : vector<8x128xf32> to vector<1x128xf32>
    %cst_16 = arith.constant 0.000000e+00 : f32
    %60 = vector.broadcast %cst_16 : f32 to vector<1x128xf32>
    %61 = arith.maximumf %59, %60 : vector<1x128xf32>
    %62 = vector.broadcast %61 : vector<1x128xf32> to vector<8x128xf32>
    %63 = arith.mulf %25, %62 : vector<8x128xf32>
    %64 = arith.addf %58, %63 : vector<8x128xf32>
    %65 = vector.extract_strided_slice %64 {offsets = [6, 0], sizes = [1, 128], strides = [1, 1]} : vector<8x128xf32> to vector<1x128xf32>
    %cst_17 = arith.constant 0.000000e+00 : f32
    %66 = vector.broadcast %cst_17 : f32 to vector<1x128xf32>
    %67 = arith.maximumf %65, %66 : vector<1x128xf32>
    %68 = vector.broadcast %67 : vector<1x128xf32> to vector<8x128xf32>
    %69 = arith.mulf %28, %68 : vector<8x128xf32>
    %70 = arith.addf %64, %69 : vector<8x128xf32>
    %cst_18 = arith.constant 0.000000e+00 : f32
    %71 = vector.broadcast %cst_18 : f32 to vector<8x128xf32>
    %72 = arith.maximumf %70, %71 : vector<8x128xf32>
    %c0_19 = arith.constant 0 : index
    %c0_20 = arith.constant 0 : index
    %73 = vector.load %arg8[%c0_19, %c0_20] : memref<48x128xf32, #tpu.memory_space<vmem>>, vector<8x128xf32>
    tpu.vector_store %arg8[%c0_19, %c0_20], %72 {strides = array<i32>} : memref<48x128xf32, #tpu.memory_space<vmem>>, vector<8x128xf32>,
    %c8 = arith.constant 8 : index
    %c0_21 = arith.constant 0 : index
    %74 = vector.load %arg7[%c8, %c0_21] : memref<32x128xf32, #tpu.memory_space<vmem>>, vector<8x128xf32>
    %c0_22 = arith.constant 0 : index
    %c8_23 = arith.constant 8 : index
    %c0_24 = arith.constant 0 : index
    %75 = vector.load %arg4[%c0_22, %c8_23, %c0_24] : memref<1x32x32xf32, #tpu.memory_space<vmem>>, vector<1x8x8xf32>
    %76 = vector.shape_cast %75 : vector<1x8x8xf32> to vector<8x8xf32>
    %c0_25 = arith.constant 0 : index
    %c0_26 = arith.constant 0 : index
    %77 = vector.load %arg8[%c0_25, %c0_26] : memref<48x128xf32, #tpu.memory_space<vmem>>, vector<8x128xf32>
    %cst_27 = arith.constant dense<0.000000e+00> : vector<8x128xf32>
    %78 = tpu.matmul %76, %77, %cst_27 {dimension_numbers = #tpu.dot_dimension_numbers<[1], [0], [0], [1], [0, 0, 1, 1], [], []>} : vector<8x8xf32>, vector<8x128xf32>, vector<8x128xf32> -> vector<8x128xf32>
    %79 = arith.addf %74, %78 : vector<8x128xf32>
    %c0_28 = arith.constant 0 : index
    %c8_29 = arith.constant 8 : index
    %c8_30 = arith.constant 8 : index
    %80 = vector.load %arg4[%c0_28, %c8_29, %c8_30] : memref<1x32x32xf32, #tpu.memory_space<vmem>>, vector<1x8x8xf32>
    %81 = vector.shape_cast %80 : vector<1x8x8xf32> to vector<8x8xf32>
    %82 = vector.extract_strided_slice %81 {offsets = [0, 0], sizes = [8, 1], strides = [1, 1]} : vector<8x8xf32> to vector<8x1xf32>
    %83 = vector.shape_cast %82 : vector<8x1xf32> to vector<8x1xf32>
    %84 = vector.broadcast %83 : vector<8x1xf32> to vector<8x128xf32>
    %85 = vector.extract_strided_slice %81 {offsets = [0, 1], sizes = [8, 1], strides = [1, 1]} : vector<8x8xf32> to vector<8x1xf32>
    %86 = vector.shape_cast %85 : vector<8x1xf32> to vector<8x1xf32>
    %87 = vector.broadcast %86 : vector<8x1xf32> to vector<8x128xf32>
    %88 = vector.extract_strided_slice %81 {offsets = [0, 2], sizes = [8, 1], strides = [1, 1]} : vector<8x8xf32> to vector<8x1xf32>
    %89 = vector.shape_cast %88 : vector<8x1xf32> to vector<8x1xf32>
    %90 = vector.broadcast %89 : vector<8x1xf32> to vector<8x128xf32>
    %91 = vector.extract_strided_slice %81 {offsets = [0, 3], sizes = [8, 1], strides = [1, 1]} : vector<8x8xf32> to vector<8x1xf32>
    %92 = vector.shape_cast %91 : vector<8x1xf32> to vector<8x1xf32>
    %93 = vector.broadcast %92 : vector<8x1xf32> to vector<8x128xf32>
    %94 = vector.extract_strided_slice %81 {offsets = [0, 4], sizes = [8, 1], strides = [1, 1]} : vector<8x8xf32> to vector<8x1xf32>
    %95 = vector.shape_cast %94 : vector<8x1xf32> to vector<8x1xf32>
    %96 = vector.broadcast %95 : vector<8x1xf32> to vector<8x128xf32>
    %97 = vector.extract_strided_slice %81 {offsets = [0, 5], sizes = [8, 1], strides = [1, 1]} : vector<8x8xf32> to vector<8x1xf32>
    %98 = vector.shape_cast %97 : vector<8x1xf32> to vector<8x1xf32>
    %99 = vector.broadcast %98 : vector<8x1xf32> to vector<8x128xf32>
    %100 = vector.extract_strided_slice %81 {offsets = [0, 6], sizes = [8, 1], strides = [1, 1]} : vector<8x8xf32> to vector<8x1xf32>
    %101 = vector.shape_cast %100 : vector<8x1xf32> to vector<8x1xf32>
    %102 = vector.broadcast %101 : vector<8x1xf32> to vector<8x128xf32>
    %103 = vector.extract_strided_slice %79 {offsets = [0, 0], sizes = [1, 128], strides = [1, 1]} : vector<8x128xf32> to vector<1x128xf32>
    %cst_31 = arith.constant 0.000000e+00 : f32
    %104 = vector.broadcast %cst_31 : f32 to vector<1x128xf32>
    %105 = arith.maximumf %103, %104 : vector<1x128xf32>
    %106 = vector.broadcast %105 : vector<1x128xf32> to vector<8x128xf32>
    %107 = arith.mulf %84, %106 : vector<8x128xf32>
    %108 = arith.addf %79, %107 : vector<8x128xf32>
    %109 = vector.extract_strided_slice %108 {offsets = [1, 0], sizes = [1, 128], strides = [1, 1]} : vector<8x128xf32> to vector<1x128xf32>
    %cst_32 = arith.constant 0.000000e+00 : f32
    %110 = vector.broadcast %cst_32 : f32 to vector<1x128xf32>
    %111 = arith.maximumf %109, %110 : vector<1x128xf32>
    %112 = vector.broadcast %111 : vector<1x128xf32> to vector<8x128xf32>
    %113 = arith.mulf %87, %112 : vector<8x128xf32>
    %114 = arith.addf %108, %113 : vector<8x128xf32>
    %115 = vector.extract_strided_slice %114 {offsets = [2, 0], sizes = [1, 128], strides = [1, 1]} : vector<8x128xf32> to vector<1x128xf32>
    %cst_33 = arith.constant 0.000000e+00 : f32
    %116 = vector.broadcast %cst_33 : f32 to vector<1x128xf32>
    %117 = arith.maximumf %115, %116 : vector<1x128xf32>
    %118 = vector.broadcast %117 : vector<1x128xf32> to vector<8x128xf32>
    %119 = arith.mulf %90, %118 : vector<8x128xf32>
    %120 = arith.addf %114, %119 : vector<8x128xf32>
    %121 = vector.extract_strided_slice %120 {offsets = [3, 0], sizes = [1, 128], strides = [1, 1]} : vector<8x128xf32> to vector<1x128xf32>
    %cst_34 = arith.constant 0.000000e+00 : f32
    %122 = vector.broadcast %cst_34 : f32 to vector<1x128xf32>
    %123 = arith.maximumf %121, %122 : vector<1x128xf32>
    %124 = vector.broadcast %123 : vector<1x128xf32> to vector<8x128xf32>
    %125 = arith.mulf %93, %124 : vector<8x128xf32>
    %126 = arith.addf %120, %125 : vector<8x128xf32>
    %127 = vector.extract_strided_slice %126 {offsets = [4, 0], sizes = [1, 128], strides = [1, 1]} : vector<8x128xf32> to vector<1x128xf32>
    %cst_35 = arith.constant 0.000000e+00 : f32
    %128 = vector.broadcast %cst_35 : f32 to vector<1x128xf32>
    %129 = arith.maximumf %127, %128 : vector<1x128xf32>
    %130 = vector.broadcast %129 : vector<1x128xf32> to vector<8x128xf32>
    %131 = arith.mulf %96, %130 : vector<8x128xf32>
    %132 = arith.addf %126, %131 : vector<8x128xf32>
    %133 = vector.extract_strided_slice %132 {offsets = [5, 0], sizes = [1, 128], strides = [1, 1]} : vector<8x128xf32> to vector<1x128xf32>
    %cst_36 = arith.constant 0.000000e+00 : f32
    %134 = vector.broadcast %cst_36 : f32 to vector<1x128xf32>
    %135 = arith.maximumf %133, %134 : vector<1x128xf32>
    %136 = vector.broadcast %135 : vector<1x128xf32> to vector<8x128xf32>
    %137 = arith.mulf %99, %136 : vector<8x128xf32>
    %138 = arith.addf %132, %137 : vector<8x128xf32>
    %139 = vector.extract_strided_slice %138 {offsets = [6, 0], sizes = [1, 128], strides = [1, 1]} : vector<8x128xf32> to vector<1x128xf32>
    %cst_37 = arith.constant 0.000000e+00 : f32
    %140 = vector.broadcast %cst_37 : f32 to vector<1x128xf32>
    %141 = arith.maximumf %139, %140 : vector<1x128xf32>
    %142 = vector.broadcast %141 : vector<1x128xf32> to vector<8x128xf32>
    %143 = arith.mulf %102, %142 : vector<8x128xf32>
    %144 = arith.addf %138, %143 : vector<8x128xf32>
    %cst_38 = arith.constant 0.000000e+00 : f32
    %145 = vector.broadcast %cst_38 : f32 to vector<8x128xf32>
    %146 = arith.maximumf %144, %145 : vector<8x128xf32>
    %c8_39 = arith.constant 8 : index
    %c0_40 = arith.constant 0 : index
    %147 = vector.load %arg8[%c8_39, %c0_40] : memref<48x128xf32, #tpu.memory_space<vmem>>, vector<8x128xf32>
    tpu.vector_store %arg8[%c8_39, %c0_40], %146 {strides = array<i32>} : memref<48x128xf32, #tpu.memory_space<vmem>>, vector<8x128xf32>,
    %c16 = arith.constant 16 : index
    %c0_41 = arith.constant 0 : index
    %148 = vector.load %arg7[%c16, %c0_41] : memref<32x128xf32, #tpu.memory_space<vmem>>, vector<8x128xf32>
    %c0_42 = arith.constant 0 : index
    %c16_43 = arith.constant 16 : index
    %c0_44 = arith.constant 0 : index
    %149 = vector.load %arg4[%c0_42, %c16_43, %c0_44] : memref<1x32x32xf32, #tpu.memory_space<vmem>>, vector<1x8x16xf32>
    %150 = vector.shape_cast %149 : vector<1x8x16xf32> to vector<8x16xf32>
    %c0_45 = arith.constant 0 : index
    %c0_46 = arith.constant 0 : index
    %151 = vector.load %arg8[%c0_45, %c0_46] : memref<48x128xf32, #tpu.memory_space<vmem>>, vector<16x128xf32>
    %cst_47 = arith.constant dense<0.000000e+00> : vector<8x128xf32>
    %152 = tpu.matmul %150, %151, %cst_47 {dimension_numbers = #tpu.dot_dimension_numbers<[1], [0], [0], [1], [0, 0, 1, 1], [], []>} : vector<8x16xf32>, vector<16x128xf32>, vector<8x128xf32> -> vector<8x128xf32>
    %153 = arith.addf %148, %152 : vector<8x128xf32>
    %c0_48 = arith.constant 0 : index
    %c16_49 = arith.constant 16 : index
    %c16_50 = arith.constant 16 : index
    %154 = vector.load %arg4[%c0_48, %c16_49, %c16_50] : memref<1x32x32xf32, #tpu.memory_space<vmem>>, vector<1x8x8xf32>
    %155 = vector.shape_cast %154 : vector<1x8x8xf32> to vector<8x8xf32>
    %156 = vector.extract_strided_slice %155 {offsets = [0, 0], sizes = [8, 1], strides = [1, 1]} : vector<8x8xf32> to vector<8x1xf32>
    %157 = vector.shape_cast %156 : vector<8x1xf32> to vector<8x1xf32>
    %158 = vector.broadcast %157 : vector<8x1xf32> to vector<8x128xf32>
    %159 = vector.extract_strided_slice %155 {offsets = [0, 1], sizes = [8, 1], strides = [1, 1]} : vector<8x8xf32> to vector<8x1xf32>
    %160 = vector.shape_cast %159 : vector<8x1xf32> to vector<8x1xf32>
    %161 = vector.broadcast %160 : vector<8x1xf32> to vector<8x128xf32>
    %162 = vector.extract_strided_slice %155 {offsets = [0, 2], sizes = [8, 1], strides = [1, 1]} : vector<8x8xf32> to vector<8x1xf32>
    %163 = vector.shape_cast %162 : vector<8x1xf32> to vector<8x1xf32>
    %164 = vector.broadcast %163 : vector<8x1xf32> to vector<8x128xf32>
    %165 = vector.extract_strided_slice %155 {offsets = [0, 3], sizes = [8, 1], strides = [1, 1]} : vector<8x8xf32> to vector<8x1xf32>
    %166 = vector.shape_cast %165 : vector<8x1xf32> to vector<8x1xf32>
    %167 = vector.broadcast %166 : vector<8x1xf32> to vector<8x128xf32>
    %168 = vector.extract_strided_slice %155 {offsets = [0, 4], sizes = [8, 1], strides = [1, 1]} : vector<8x8xf32> to vector<8x1xf32>
    %169 = vector.shape_cast %168 : vector<8x1xf32> to vector<8x1xf32>
    %170 = vector.broadcast %169 : vector<8x1xf32> to vector<8x128xf32>
    %171 = vector.extract_strided_slice %155 {offsets = [0, 5], sizes = [8, 1], strides = [1, 1]} : vector<8x8xf32> to vector<8x1xf32>
    %172 = vector.shape_cast %171 : vector<8x1xf32> to vector<8x1xf32>
    %173 = vector.broadcast %172 : vector<8x1xf32> to vector<8x128xf32>
    %174 = vector.extract_strided_slice %155 {offsets = [0, 6], sizes = [8, 1], strides = [1, 1]} : vector<8x8xf32> to vector<8x1xf32>
    %175 = vector.shape_cast %174 : vector<8x1xf32> to vector<8x1xf32>
    %176 = vector.broadcast %175 : vector<8x1xf32> to vector<8x128xf32>
    %177 = vector.extract_strided_slice %153 {offsets = [0, 0], sizes = [1, 128], strides = [1, 1]} : vector<8x128xf32> to vector<1x128xf32>
    %cst_51 = arith.constant 0.000000e+00 : f32
    %178 = vector.broadcast %cst_51 : f32 to vector<1x128xf32>
    %179 = arith.maximumf %177, %178 : vector<1x128xf32>
    %180 = vector.broadcast %179 : vector<1x128xf32> to vector<8x128xf32>
    %181 = arith.mulf %158, %180 : vector<8x128xf32>
    %182 = arith.addf %153, %181 : vector<8x128xf32>
    %183 = vector.extract_strided_slice %182 {offsets = [1, 0], sizes = [1, 128], strides = [1, 1]} : vector<8x128xf32> to vector<1x128xf32>
    %cst_52 = arith.constant 0.000000e+00 : f32
    %184 = vector.broadcast %cst_52 : f32 to vector<1x128xf32>
    %185 = arith.maximumf %183, %184 : vector<1x128xf32>
    %186 = vector.broadcast %185 : vector<1x128xf32> to vector<8x128xf32>
    %187 = arith.mulf %161, %186 : vector<8x128xf32>
    %188 = arith.addf %182, %187 : vector<8x128xf32>
    %189 = vector.extract_strided_slice %188 {offsets = [2, 0], sizes = [1, 128], strides = [1, 1]} : vector<8x128xf32> to vector<1x128xf32>
    %cst_53 = arith.constant 0.000000e+00 : f32
    %190 = vector.broadcast %cst_53 : f32 to vector<1x128xf32>
    %191 = arith.maximumf %189, %190 : vector<1x128xf32>
    %192 = vector.broadcast %191 : vector<1x128xf32> to vector<8x128xf32>
    %193 = arith.mulf %164, %192 : vector<8x128xf32>
    %194 = arith.addf %188, %193 : vector<8x128xf32>
    %195 = vector.extract_strided_slice %194 {offsets = [3, 0], sizes = [1, 128], strides = [1, 1]} : vector<8x128xf32> to vector<1x128xf32>
    %cst_54 = arith.constant 0.000000e+00 : f32
    %196 = vector.broadcast %cst_54 : f32 to vector<1x128xf32>
    %197 = arith.maximumf %195, %196 : vector<1x128xf32>
    %198 = vector.broadcast %197 : vector<1x128xf32> to vector<8x128xf32>
    %199 = arith.mulf %167, %198 : vector<8x128xf32>
    %200 = arith.addf %194, %199 : vector<8x128xf32>
    %201 = vector.extract_strided_slice %200 {offsets = [4, 0], sizes = [1, 128], strides = [1, 1]} : vector<8x128xf32> to vector<1x128xf32>
    %cst_55 = arith.constant 0.000000e+00 : f32
    %202 = vector.broadcast %cst_55 : f32 to vector<1x128xf32>
    %203 = arith.maximumf %201, %202 : vector<1x128xf32>
    %204 = vector.broadcast %203 : vector<1x128xf32> to vector<8x128xf32>
    %205 = arith.mulf %170, %204 : vector<8x128xf32>
    %206 = arith.addf %200, %205 : vector<8x128xf32>
    %207 = vector.extract_strided_slice %206 {offsets = [5, 0], sizes = [1, 128], strides = [1, 1]} : vector<8x128xf32> to vector<1x128xf32>
    %cst_56 = arith.constant 0.000000e+00 : f32
    %208 = vector.broadcast %cst_56 : f32 to vector<1x128xf32>
    %209 = arith.maximumf %207, %208 : vector<1x128xf32>
    %210 = vector.broadcast %209 : vector<1x128xf32> to vector<8x128xf32>
    %211 = arith.mulf %173, %210 : vector<8x128xf32>
    %212 = arith.addf %206, %211 : vector<8x128xf32>
    %213 = vector.extract_strided_slice %212 {offsets = [6, 0], sizes = [1, 128], strides = [1, 1]} : vector<8x128xf32> to vector<1x128xf32>
    %cst_57 = arith.constant 0.000000e+00 : f32
    %214 = vector.broadcast %cst_57 : f32 to vector<1x128xf32>
    %215 = arith.maximumf %213, %214 : vector<1x128xf32>
    %216 = vector.broadcast %215 : vector<1x128xf32> to vector<8x128xf32>
    %217 = arith.mulf %176, %216 : vector<8x128xf32>
    %218 = arith.addf %212, %217 : vector<8x128xf32>
    %cst_58 = arith.constant 0.000000e+00 : f32
    %219 = vector.broadcast %cst_58 : f32 to vector<8x128xf32>
    %220 = arith.maximumf %218, %219 : vector<8x128xf32>
    %c16_59 = arith.constant 16 : index
    %c0_60 = arith.constant 0 : index
    %221 = vector.load %arg8[%c16_59, %c0_60] : memref<48x128xf32, #tpu.memory_space<vmem>>, vector<8x128xf32>
    tpu.vector_store %arg8[%c16_59, %c0_60], %220 {strides = array<i32>} : memref<48x128xf32, #tpu.memory_space<vmem>>, vector<8x128xf32>,
    %c24 = arith.constant 24 : index
    %c0_61 = arith.constant 0 : index
    %222 = vector.load %arg7[%c24, %c0_61] : memref<32x128xf32, #tpu.memory_space<vmem>>, vector<8x128xf32>
    %c0_62 = arith.constant 0 : index
    %c24_63 = arith.constant 24 : index
    %c0_64 = arith.constant 0 : index
    %223 = vector.load %arg4[%c0_62, %c24_63, %c0_64] : memref<1x32x32xf32, #tpu.memory_space<vmem>>, vector<1x8x24xf32>
    %224 = vector.shape_cast %223 : vector<1x8x24xf32> to vector<8x24xf32>
    %c0_65 = arith.constant 0 : index
    %c0_66 = arith.constant 0 : index
    %225 = vector.load %arg8[%c0_65, %c0_66] : memref<48x128xf32, #tpu.memory_space<vmem>>, vector<24x128xf32>
    %cst_67 = arith.constant dense<0.000000e+00> : vector<8x128xf32>
    %226 = tpu.matmul %224, %225, %cst_67 {dimension_numbers = #tpu.dot_dimension_numbers<[1], [0], [0], [1], [0, 0, 1, 1], [], []>} : vector<8x24xf32>, vector<24x128xf32>, vector<8x128xf32> -> vector<8x128xf32>
    %227 = arith.addf %222, %226 : vector<8x128xf32>
    %c0_68 = arith.constant 0 : index
    %c24_69 = arith.constant 24 : index
    %c24_70 = arith.constant 24 : index
    %228 = vector.load %arg4[%c0_68, %c24_69, %c24_70] : memref<1x32x32xf32, #tpu.memory_space<vmem>>, vector<1x8x8xf32>
    %229 = vector.shape_cast %228 : vector<1x8x8xf32> to vector<8x8xf32>
    %230 = vector.extract_strided_slice %229 {offsets = [0, 0], sizes = [8, 1], strides = [1, 1]} : vector<8x8xf32> to vector<8x1xf32>
    %231 = vector.shape_cast %230 : vector<8x1xf32> to vector<8x1xf32>
    %232 = vector.broadcast %231 : vector<8x1xf32> to vector<8x128xf32>
    %233 = vector.extract_strided_slice %229 {offsets = [0, 1], sizes = [8, 1], strides = [1, 1]} : vector<8x8xf32> to vector<8x1xf32>
    %234 = vector.shape_cast %233 : vector<8x1xf32> to vector<8x1xf32>
    %235 = vector.broadcast %234 : vector<8x1xf32> to vector<8x128xf32>
    %236 = vector.extract_strided_slice %229 {offsets = [0, 2], sizes = [8, 1], strides = [1, 1]} : vector<8x8xf32> to vector<8x1xf32>
    %237 = vector.shape_cast %236 : vector<8x1xf32> to vector<8x1xf32>
    %238 = vector.broadcast %237 : vector<8x1xf32> to vector<8x128xf32>
    %239 = vector.extract_strided_slice %229 {offsets = [0, 3], sizes = [8, 1], strides = [1, 1]} : vector<8x8xf32> to vector<8x1xf32>
    %240 = vector.shape_cast %239 : vector<8x1xf32> to vector<8x1xf32>
    %241 = vector.broadcast %240 : vector<8x1xf32> to vector<8x128xf32>
    %242 = vector.extract_strided_slice %229 {offsets = [0, 4], sizes = [8, 1], strides = [1, 1]} : vector<8x8xf32> to vector<8x1xf32>
    %243 = vector.shape_cast %242 : vector<8x1xf32> to vector<8x1xf32>
    %244 = vector.broadcast %243 : vector<8x1xf32> to vector<8x128xf32>
    %245 = vector.extract_strided_slice %229 {offsets = [0, 5], sizes = [8, 1], strides = [1, 1]} : vector<8x8xf32> to vector<8x1xf32>
    %246 = vector.shape_cast %245 : vector<8x1xf32> to vector<8x1xf32>
    %247 = vector.broadcast %246 : vector<8x1xf32> to vector<8x128xf32>
    %248 = vector.extract_strided_slice %229 {offsets = [0, 6], sizes = [8, 1], strides = [1, 1]} : vector<8x8xf32> to vector<8x1xf32>
    %249 = vector.shape_cast %248 : vector<8x1xf32> to vector<8x1xf32>
    %250 = vector.broadcast %249 : vector<8x1xf32> to vector<8x128xf32>
    %251 = vector.extract_strided_slice %227 {offsets = [0, 0], sizes = [1, 128], strides = [1, 1]} : vector<8x128xf32> to vector<1x128xf32>
    %cst_71 = arith.constant 0.000000e+00 : f32
    %252 = vector.broadcast %cst_71 : f32 to vector<1x128xf32>
    %253 = arith.maximumf %251, %252 : vector<1x128xf32>
    %254 = vector.broadcast %253 : vector<1x128xf32> to vector<8x128xf32>
    %255 = arith.mulf %232, %254 : vector<8x128xf32>
    %256 = arith.addf %227, %255 : vector<8x128xf32>
    %257 = vector.extract_strided_slice %256 {offsets = [1, 0], sizes = [1, 128], strides = [1, 1]} : vector<8x128xf32> to vector<1x128xf32>
    %cst_72 = arith.constant 0.000000e+00 : f32
    %258 = vector.broadcast %cst_72 : f32 to vector<1x128xf32>
    %259 = arith.maximumf %257, %258 : vector<1x128xf32>
    %260 = vector.broadcast %259 : vector<1x128xf32> to vector<8x128xf32>
    %261 = arith.mulf %235, %260 : vector<8x128xf32>
    %262 = arith.addf %256, %261 : vector<8x128xf32>
    %263 = vector.extract_strided_slice %262 {offsets = [2, 0], sizes = [1, 128], strides = [1, 1]} : vector<8x128xf32> to vector<1x128xf32>
    %cst_73 = arith.constant 0.000000e+00 : f32
    %264 = vector.broadcast %cst_73 : f32 to vector<1x128xf32>
    %265 = arith.maximumf %263, %264 : vector<1x128xf32>
    %266 = vector.broadcast %265 : vector<1x128xf32> to vector<8x128xf32>
    %267 = arith.mulf %238, %266 : vector<8x128xf32>
    %268 = arith.addf %262, %267 : vector<8x128xf32>
    %269 = vector.extract_strided_slice %268 {offsets = [3, 0], sizes = [1, 128], strides = [1, 1]} : vector<8x128xf32> to vector<1x128xf32>
    %cst_74 = arith.constant 0.000000e+00 : f32
    %270 = vector.broadcast %cst_74 : f32 to vector<1x128xf32>
    %271 = arith.maximumf %269, %270 : vector<1x128xf32>
    %272 = vector.broadcast %271 : vector<1x128xf32> to vector<8x128xf32>
    %273 = arith.mulf %241, %272 : vector<8x128xf32>
    %274 = arith.addf %268, %273 : vector<8x128xf32>
    %275 = vector.extract_strided_slice %274 {offsets = [4, 0], sizes = [1, 128], strides = [1, 1]} : vector<8x128xf32> to vector<1x128xf32>
    %cst_75 = arith.constant 0.000000e+00 : f32
    %276 = vector.broadcast %cst_75 : f32 to vector<1x128xf32>
    %277 = arith.maximumf %275, %276 : vector<1x128xf32>
    %278 = vector.broadcast %277 : vector<1x128xf32> to vector<8x128xf32>
    %279 = arith.mulf %244, %278 : vector<8x128xf32>
    %280 = arith.addf %274, %279 : vector<8x128xf32>
    %281 = vector.extract_strided_slice %280 {offsets = [5, 0], sizes = [1, 128], strides = [1, 1]} : vector<8x128xf32> to vector<1x128xf32>
    %cst_76 = arith.constant 0.000000e+00 : f32
    %282 = vector.broadcast %cst_76 : f32 to vector<1x128xf32>
    %283 = arith.maximumf %281, %282 : vector<1x128xf32>
    %284 = vector.broadcast %283 : vector<1x128xf32> to vector<8x128xf32>
    %285 = arith.mulf %247, %284 : vector<8x128xf32>
    %286 = arith.addf %280, %285 : vector<8x128xf32>
    %287 = vector.extract_strided_slice %286 {offsets = [6, 0], sizes = [1, 128], strides = [1, 1]} : vector<8x128xf32> to vector<1x128xf32>
    %cst_77 = arith.constant 0.000000e+00 : f32
    %288 = vector.broadcast %cst_77 : f32 to vector<1x128xf32>
    %289 = arith.maximumf %287, %288 : vector<1x128xf32>
    %290 = vector.broadcast %289 : vector<1x128xf32> to vector<8x128xf32>
    %291 = arith.mulf %250, %290 : vector<8x128xf32>
    %292 = arith.addf %286, %291 : vector<8x128xf32>
    %cst_78 = arith.constant 0.000000e+00 : f32
    %293 = vector.broadcast %cst_78 : f32 to vector<8x128xf32>
    %294 = arith.maximumf %292, %293 : vector<8x128xf32>
    %c24_79 = arith.constant 24 : index
    %c0_80 = arith.constant 0 : index
    %295 = vector.load %arg8[%c24_79, %c0_80] : memref<48x128xf32, #tpu.memory_space<vmem>>, vector<8x128xf32>
    tpu.vector_store %arg8[%c24_79, %c0_80], %294 {strides = array<i32>} : memref<48x128xf32, #tpu.memory_space<vmem>>, vector<8x128xf32>,
    %c0_81 = arith.constant 0 : index
    %c0_82 = arith.constant 0 : index
    %296 = vector.load %arg5[%c0_81, %c0_82] : memref<8x48xf32, #tpu.memory_space<vmem>>, vector<8x48xf32>
    %c0_83 = arith.constant 0 : index
    %c0_84 = arith.constant 0 : index
    %297 = vector.load %arg8[%c0_83, %c0_84] : memref<48x128xf32, #tpu.memory_space<vmem>>, vector<48x128xf32>
    %cst_85 = arith.constant dense<0.000000e+00> : vector<8x128xf32>
    %298 = tpu.matmul %296, %297, %cst_85 {dimension_numbers = #tpu.dot_dimension_numbers<[1], [0], [0], [1], [0, 0, 1, 1], [], []>} : vector<8x48xf32>, vector<48x128xf32>, vector<8x128xf32> -> vector<8x128xf32>
    %c0_86 = arith.constant 0 : index
    %c0_87 = arith.constant 0 : index
    %299 = vector.load %arg6[%c0_86, %c0_87] : memref<8x128xf32, #tpu.memory_space<vmem>>, vector<8x128xf32>
    tpu.vector_store %arg6[%c0_86, %c0_87], %298 {strides = array<i32>} : memref<8x128xf32, #tpu.memory_space<vmem>>, vector<8x128xf32>,
    return
  }
  func.func @transform_0(%arg0: i32) -> (i32, i32) {
    %c0_i32 = arith.constant 0 : i32
    %c0_i32_0 = arith.constant 0 : i32
    return %c0_i32, %arg0 : i32, i32
  }
  func.func @transform_1(%arg0: i32) -> (i32, i32) {
    %c0_i32 = arith.constant 0 : i32
    %c0_i32_0 = arith.constant 0 : i32
    %c0_i32_1 = arith.constant 0 : i32
    return %c0_i32, %c0_i32_0 : i32, i32
  }
  func.func @transform_2(%arg0: i32) -> (i32, i32) {
    %c0_i32 = arith.constant 0 : i32
    %c0_i32_0 = arith.constant 0 : i32
    %c0_i32_1 = arith.constant 0 : i32
    return %c0_i32, %c0_i32_0 : i32, i32
  }
  func.func @transform_3(%arg0: i32) -> (i32, i32, i32) {
    %c0_i32 = arith.constant 0 : i32
    %c0_i32_0 = arith.constant 0 : i32
    %c0_i32_1 = arith.constant 0 : i32
    %c0_i32_2 = arith.constant 0 : i32
    return %c0_i32, %c0_i32_0, %c0_i32_1 : i32, i32, i32
  }
  func.func @transform_4(%arg0: i32) -> (i32, i32) {
    %c0_i32 = arith.constant 0 : i32
    %c0_i32_0 = arith.constant 0 : i32
    %c0_i32_1 = arith.constant 0 : i32
    return %c0_i32, %c0_i32_0 : i32, i32
  }
  func.func @transform_5(%arg0: i32) -> (i32, i32) {
    %c0_i32 = arith.constant 0 : i32
    %c0_i32_0 = arith.constant 0 : i32
    return %c0_i32, %arg0 : i32, i32
  }
}

module attributes {stable_mosaic.version = 11 : i64} {
  func.func @ren_kernel(%arg0: i32, %arg1: memref<16x128xf32, #tpu.memory_space<vmem>>, %arg2: memref<32x16xf32, #tpu.memory_space<vmem>>, %arg3: memref<32x32xf32, #tpu.memory_space<vmem>>, %arg4: memref<1x32x32xf32, #tpu.memory_space<vmem>>, %arg5: memref<8x48xf32, #tpu.memory_space<vmem>>, %arg6: memref<8x128xf32, #tpu.memory_space<vmem>>, %arg7: memref<32x128xf32, #tpu.memory_space<vmem>>, %arg8: memref<48x128xf32, #tpu.memory_space<vmem>>) attributes {dimension_semantics = [#tpu.dimension_semantics<parallel>], iteration_bounds = array<i64: 1>, scalar_prefetch = 0 : i64, scratch_operands = 2 : i64, tpu.core_type = #tpu.core_type<tc>, window_params = [{transform_indices = @transform_0, window_bounds = array<i64: 16, 128>}, {pipeline_mode = #tpu.pipeline_mode<synchronous>, transform_indices = @transform_1, window_bounds = array<i64: 32, 16>}, {pipeline_mode = #tpu.pipeline_mode<synchronous>, transform_indices = @transform_2, window_bounds = array<i64: 32, 32>}, {pipeline_mode = #tpu.pipeline_mode<synchronous>, transform_indices = @transform_3, window_bounds = array<i64: 1, 32, 32>}, {pipeline_mode = #tpu.pipeline_mode<synchronous>, transform_indices = @transform_4, window_bounds = array<i64: 8, 48>}, {transform_indices = @transform_5, window_bounds = array<i64: 8, 128>}]} {
    %c0 = arith.constant 0 : index
    %c0_0 = arith.constant 0 : index
    %0 = vector.load %arg1[%c0, %c0_0] : memref<16x128xf32, #tpu.memory_space<vmem>>, vector<16x128xf32>
    %c32 = arith.constant 32 : index
    %c0_1 = arith.constant 0 : index
    %1 = vector.load %arg8[%c32, %c0_1] : memref<48x128xf32, #tpu.memory_space<vmem>>, vector<16x128xf32>
    tpu.vector_store %arg8[%c32, %c0_1], %0 {strides = array<i32>} : memref<48x128xf32, #tpu.memory_space<vmem>>, vector<16x128xf32>,
    %c0_2 = arith.constant 0 : index
    %c0_3 = arith.constant 0 : index
    %2 = vector.load %arg2[%c0_2, %c0_3] : memref<32x16xf32, #tpu.memory_space<vmem>>, vector<32x16xf32>
    %cst = arith.constant dense<0.000000e+00> : vector<32x128xf32>
    %3 = tpu.matmul %2, %0, %cst {dimension_numbers = #tpu.dot_dimension_numbers<[1], [0], [0], [1], [0, 0, 1, 1], [], []>} : vector<32x16xf32>, vector<16x128xf32>, vector<32x128xf32> -> vector<32x128xf32>
    %c0_4 = arith.constant 0 : index
    %c0_5 = arith.constant 0 : index
    %4 = vector.load %arg7[%c0_4, %c0_5] : memref<32x128xf32, #tpu.memory_space<vmem>>, vector<32x128xf32>
    tpu.vector_store %arg7[%c0_4, %c0_5], %3 {strides = array<i32>} : memref<32x128xf32, #tpu.memory_space<vmem>>, vector<32x128xf32>,
    %c0_6 = arith.constant 0 : index
    %c0_7 = arith.constant 0 : index
    %5 = vector.load %arg7[%c0_6, %c0_7] : memref<32x128xf32, #tpu.memory_space<vmem>>, vector<8x128xf32>
    %c0_8 = arith.constant 0 : index
    %c0_9 = arith.constant 0 : index
    %c0_10 = arith.constant 0 : index
    %6 = vector.load %arg4[%c0_8, %c0_9, %c0_10] : memref<1x32x32xf32, #tpu.memory_space<vmem>>, vector<1x8x8xf32>
    %7 = vector.shape_cast %6 : vector<1x8x8xf32> to vector<8x8xf32>
    %8 = vector.extract_strided_slice %7 {offsets = [0, 0], sizes = [8, 1], strides = [1, 1]} : vector<8x8xf32> to vector<8x1xf32>
    %9 = vector.shape_cast %8 : vector<8x1xf32> to vector<8x1xf32>
    %10 = vector.broadcast %9 : vector<8x1xf32> to vector<8x128xf32>
    %11 = vector.extract_strided_slice %7 {offsets = [0, 1], sizes = [8, 1], strides = [1, 1]} : vector<8x8xf32> to vector<8x1xf32>
    %12 = vector.shape_cast %11 : vector<8x1xf32> to vector<8x1xf32>
    %13 = vector.broadcast %12 : vector<8x1xf32> to vector<8x128xf32>
    %14 = vector.extract_strided_slice %7 {offsets = [0, 2], sizes = [8, 1], strides = [1, 1]} : vector<8x8xf32> to vector<8x1xf32>
    %15 = vector.shape_cast %14 : vector<8x1xf32> to vector<8x1xf32>
    %16 = vector.broadcast %15 : vector<8x1xf32> to vector<8x128xf32>
    %17 = vector.extract_strided_slice %7 {offsets = [0, 3], sizes = [8, 1], strides = [1, 1]} : vector<8x8xf32> to vector<8x1xf32>
    %18 = vector.shape_cast %17 : vector<8x1xf32> to vector<8x1xf32>
    %19 = vector.broadcast %18 : vector<8x1xf32> to vector<8x128xf32>
    %20 = vector.extract_strided_slice %7 {offsets = [0, 4], sizes = [8, 1], strides = [1, 1]} : vector<8x8xf32> to vector<8x1xf32>
    %21 = vector.shape_cast %20 : vector<8x1xf32> to vector<8x1xf32>
    %22 = vector.broadcast %21 : vector<8x1xf32> to vector<8x128xf32>
    %23 = vector.extract_strided_slice %7 {offsets = [0, 5], sizes = [8, 1], strides = [1, 1]} : vector<8x8xf32> to vector<8x1xf32>
    %24 = vector.shape_cast %23 : vector<8x1xf32> to vector<8x1xf32>
    %25 = vector.broadcast %24 : vector<8x1xf32> to vector<8x128xf32>
    %26 = vector.extract_strided_slice %7 {offsets = [0, 6], sizes = [8, 1], strides = [1, 1]} : vector<8x8xf32> to vector<8x1xf32>
    %27 = vector.shape_cast %26 : vector<8x1xf32> to vector<8x1xf32>
    %28 = vector.broadcast %27 : vector<8x1xf32> to vector<8x128xf32>
    %29 = vector.extract_strided_slice %5 {offsets = [0, 0], sizes = [1, 128], strides = [1, 1]} : vector<8x128xf32> to vector<1x128xf32>
    %cst_11 = arith.constant 0.000000e+00 : f32
    %30 = vector.broadcast %cst_11 : f32 to vector<1x128xf32>
    %31 = arith.maximumf %29, %30 : vector<1x128xf32>
    %32 = vector.broadcast %31 : vector<1x128xf32> to vector<8x128xf32>
    %33 = arith.mulf %10, %32 : vector<8x128xf32>
    %34 = arith.addf %5, %33 : vector<8x128xf32>
    %35 = vector.extract_strided_slice %34 {offsets = [1, 0], sizes = [1, 128], strides = [1, 1]} : vector<8x128xf32> to vector<1x128xf32>
    %cst_12 = arith.constant 0.000000e+00 : f32
    %36 = vector.broadcast %cst_12 : f32 to vector<1x128xf32>
    %37 = arith.maximumf %35, %36 : vector<1x128xf32>
    %38 = vector.broadcast %37 : vector<1x128xf32> to vector<8x128xf32>
    %39 = arith.mulf %13, %38 : vector<8x128xf32>
    %40 = arith.addf %34, %39 : vector<8x128xf32>
    %41 = vector.extract_strided_slice %40 {offsets = [2, 0], sizes = [1, 128], strides = [1, 1]} : vector<8x128xf32> to vector<1x128xf32>
    %cst_13 = arith.constant 0.000000e+00 : f32
    %42 = vector.broadcast %cst_13 : f32 to vector<1x128xf32>
    %43 = arith.maximumf %41, %42 : vector<1x128xf32>
    %44 = vector.broadcast %43 : vector<1x128xf32> to vector<8x128xf32>
    %45 = arith.mulf %16, %44 : vector<8x128xf32>
    %46 = arith.addf %40, %45 : vector<8x128xf32>
    %47 = vector.extract_strided_slice %46 {offsets = [3, 0], sizes = [1, 128], strides = [1, 1]} : vector<8x128xf32> to vector<1x128xf32>
    %cst_14 = arith.constant 0.000000e+00 : f32
    %48 = vector.broadcast %cst_14 : f32 to vector<1x128xf32>
    %49 = arith.maximumf %47, %48 : vector<1x128xf32>
    %50 = vector.broadcast %49 : vector<1x128xf32> to vector<8x128xf32>
    %51 = arith.mulf %19, %50 : vector<8x128xf32>
    %52 = arith.addf %46, %51 : vector<8x128xf32>
    %53 = vector.extract_strided_slice %52 {offsets = [4, 0], sizes = [1, 128], strides = [1, 1]} : vector<8x128xf32> to vector<1x128xf32>
    %cst_15 = arith.constant 0.000000e+00 : f32
    %54 = vector.broadcast %cst_15 : f32 to vector<1x128xf32>
    %55 = arith.maximumf %53, %54 : vector<1x128xf32>
    %56 = vector.broadcast %55 : vector<1x128xf32> to vector<8x128xf32>
    %57 = arith.mulf %22, %56 : vector<8x128xf32>
    %58 = arith.addf %52, %57 : vector<8x128xf32>
    %59 = vector.extract_strided_slice %58 {offsets = [5, 0], sizes = [1, 128], strides = [1, 1]} : vector<8x128xf32> to vector<1x128xf32>
    %cst_16 = arith.constant 0.000000e+00 : f32
    %60 = vector.broadcast %cst_16 : f32 to vector<1x128xf32>
    %61 = arith.maximumf %59, %60 : vector<1x128xf32>
    %62 = vector.broadcast %61 : vector<1x128xf32> to vector<8x128xf32>
    %63 = arith.mulf %25, %62 : vector<8x128xf32>
    %64 = arith.addf %58, %63 : vector<8x128xf32>
    %65 = vector.extract_strided_slice %64 {offsets = [6, 0], sizes = [1, 128], strides = [1, 1]} : vector<8x128xf32> to vector<1x128xf32>
    %cst_17 = arith.constant 0.000000e+00 : f32
    %66 = vector.broadcast %cst_17 : f32 to vector<1x128xf32>
    %67 = arith.maximumf %65, %66 : vector<1x128xf32>
    %68 = vector.broadcast %67 : vector<1x128xf32> to vector<8x128xf32>
    %69 = arith.mulf %28, %68 : vector<8x128xf32>
    %70 = arith.addf %64, %69 : vector<8x128xf32>
    %cst_18 = arith.constant 0.000000e+00 : f32
    %71 = vector.broadcast %cst_18 : f32 to vector<8x128xf32>
    %72 = arith.maximumf %70, %71 : vector<8x128xf32>
    %c0_19 = arith.constant 0 : index
    %c0_20 = arith.constant 0 : index
    %73 = vector.load %arg8[%c0_19, %c0_20] : memref<48x128xf32, #tpu.memory_space<vmem>>, vector<8x128xf32>
    tpu.vector_store %arg8[%c0_19, %c0_20], %72 {strides = array<i32>} : memref<48x128xf32, #tpu.memory_space<vmem>>, vector<8x128xf32>,
    %c8 = arith.constant 8 : index
    %c0_21 = arith.constant 0 : index
    %74 = vector.load %arg7[%c8, %c0_21] : memref<32x128xf32, #tpu.memory_space<vmem>>, vector<8x128xf32>
    %c0_22 = arith.constant 0 : index
    %c8_23 = arith.constant 8 : index
    %c0_24 = arith.constant 0 : index
    %75 = vector.load %arg4[%c0_22, %c8_23, %c0_24] : memref<1x32x32xf32, #tpu.memory_space<vmem>>, vector<1x8x8xf32>
    %76 = vector.shape_cast %75 : vector<1x8x8xf32> to vector<8x8xf32>
    %c0_25 = arith.constant 0 : index
    %c0_26 = arith.constant 0 : index
    %77 = vector.load %arg8[%c0_25, %c0_26] : memref<48x128xf32, #tpu.memory_space<vmem>>, vector<8x128xf32>
    %cst_27 = arith.constant dense<0.000000e+00> : vector<8x128xf32>
    %78 = tpu.matmul %76, %77, %cst_27 {dimension_numbers = #tpu.dot_dimension_numbers<[1], [0], [0], [1], [0, 0, 1, 1], [], []>} : vector<8x8xf32>, vector<8x128xf32>, vector<8x128xf32> -> vector<8x128xf32>
    %79 = arith.addf %74, %78 : vector<8x128xf32>
    %c0_28 = arith.constant 0 : index
    %c8_29 = arith.constant 8 : index
    %c8_30 = arith.constant 8 : index
    %80 = vector.load %arg4[%c0_28, %c8_29, %c8_30] : memref<1x32x32xf32, #tpu.memory_space<vmem>>, vector<1x8x8xf32>
    %81 = vector.shape_cast %80 : vector<1x8x8xf32> to vector<8x8xf32>
    %82 = vector.extract_strided_slice %81 {offsets = [0, 0], sizes = [8, 1], strides = [1, 1]} : vector<8x8xf32> to vector<8x1xf32>
    %83 = vector.shape_cast %82 : vector<8x1xf32> to vector<8x1xf32>
    %84 = vector.broadcast %83 : vector<8x1xf32> to vector<8x128xf32>
    %85 = vector.extract_strided_slice %81 {offsets = [0, 1], sizes = [8, 1], strides = [1, 1]} : vector<8x8xf32> to vector<8x1xf32>
    %86 = vector.shape_cast %85 : vector<8x1xf32> to vector<8x1xf32>
    %87 = vector.broadcast %86 : vector<8x1xf32> to vector<8x128xf32>
    %88 = vector.extract_strided_slice %81 {offsets = [0, 2], sizes = [8, 1], strides = [1, 1]} : vector<8x8xf32> to vector<8x1xf32>
    %89 = vector.shape_cast %88 : vector<8x1xf32> to vector<8x1xf32>
    %90 = vector.broadcast %89 : vector<8x1xf32> to vector<8x128xf32>
    %91 = vector.extract_strided_slice %81 {offsets = [0, 3], sizes = [8, 1], strides = [1, 1]} : vector<8x8xf32> to vector<8x1xf32>
    %92 = vector.shape_cast %91 : vector<8x1xf32> to vector<8x1xf32>
    %93 = vector.broadcast %92 : vector<8x1xf32> to vector<8x128xf32>
    %94 = vector.extract_strided_slice %81 {offsets = [0, 4], sizes = [8, 1], strides = [1, 1]} : vector<8x8xf32> to vector<8x1xf32>
    %95 = vector.shape_cast %94 : vector<8x1xf32> to vector<8x1xf32>
    %96 = vector.broadcast %95 : vector<8x1xf32> to vector<8x128xf32>
    %97 = vector.extract_strided_slice %81 {offsets = [0, 5], sizes = [8, 1], strides = [1, 1]} : vector<8x8xf32> to vector<8x1xf32>
    %98 = vector.shape_cast %97 : vector<8x1xf32> to vector<8x1xf32>
    %99 = vector.broadcast %98 : vector<8x1xf32> to vector<8x128xf32>
    %100 = vector.extract_strided_slice %81 {offsets = [0, 6], sizes = [8, 1], strides = [1, 1]} : vector<8x8xf32> to vector<8x1xf32>
    %101 = vector.shape_cast %100 : vector<8x1xf32> to vector<8x1xf32>
    %102 = vector.broadcast %101 : vector<8x1xf32> to vector<8x128xf32>
    %103 = vector.extract_strided_slice %79 {offsets = [0, 0], sizes = [1, 128], strides = [1, 1]} : vector<8x128xf32> to vector<1x128xf32>
    %cst_31 = arith.constant 0.000000e+00 : f32
    %104 = vector.broadcast %cst_31 : f32 to vector<1x128xf32>
    %105 = arith.maximumf %103, %104 : vector<1x128xf32>
    %106 = vector.broadcast %105 : vector<1x128xf32> to vector<8x128xf32>
    %107 = arith.mulf %84, %106 : vector<8x128xf32>
    %108 = arith.addf %79, %107 : vector<8x128xf32>
    %109 = vector.extract_strided_slice %108 {offsets = [1, 0], sizes = [1, 128], strides = [1, 1]} : vector<8x128xf32> to vector<1x128xf32>
    %cst_32 = arith.constant 0.000000e+00 : f32
    %110 = vector.broadcast %cst_32 : f32 to vector<1x128xf32>
    %111 = arith.maximumf %109, %110 : vector<1x128xf32>
    %112 = vector.broadcast %111 : vector<1x128xf32> to vector<8x128xf32>
    %113 = arith.mulf %87, %112 : vector<8x128xf32>
    %114 = arith.addf %108, %113 : vector<8x128xf32>
    %115 = vector.extract_strided_slice %114 {offsets = [2, 0], sizes = [1, 128], strides = [1, 1]} : vector<8x128xf32> to vector<1x128xf32>
    %cst_33 = arith.constant 0.000000e+00 : f32
    %116 = vector.broadcast %cst_33 : f32 to vector<1x128xf32>
    %117 = arith.maximumf %115, %116 : vector<1x128xf32>
    %118 = vector.broadcast %117 : vector<1x128xf32> to vector<8x128xf32>
    %119 = arith.mulf %90, %118 : vector<8x128xf32>
    %120 = arith.addf %114, %119 : vector<8x128xf32>
    %121 = vector.extract_strided_slice %120 {offsets = [3, 0], sizes = [1, 128], strides = [1, 1]} : vector<8x128xf32> to vector<1x128xf32>
    %cst_34 = arith.constant 0.000000e+00 : f32
    %122 = vector.broadcast %cst_34 : f32 to vector<1x128xf32>
    %123 = arith.maximumf %121, %122 : vector<1x128xf32>
    %124 = vector.broadcast %123 : vector<1x128xf32> to vector<8x128xf32>
    %125 = arith.mulf %93, %124 : vector<8x128xf32>
    %126 = arith.addf %120, %125 : vector<8x128xf32>
    %127 = vector.extract_strided_slice %126 {offsets = [4, 0], sizes = [1, 128], strides = [1, 1]} : vector<8x128xf32> to vector<1x128xf32>
    %cst_35 = arith.constant 0.000000e+00 : f32
    %128 = vector.broadcast %cst_35 : f32 to vector<1x128xf32>
    %129 = arith.maximumf %127, %128 : vector<1x128xf32>
    %130 = vector.broadcast %129 : vector<1x128xf32> to vector<8x128xf32>
    %131 = arith.mulf %96, %130 : vector<8x128xf32>
    %132 = arith.addf %126, %131 : vector<8x128xf32>
    %133 = vector.extract_strided_slice %132 {offsets = [5, 0], sizes = [1, 128], strides = [1, 1]} : vector<8x128xf32> to vector<1x128xf32>
    %cst_36 = arith.constant 0.000000e+00 : f32
    %134 = vector.broadcast %cst_36 : f32 to vector<1x128xf32>
    %135 = arith.maximumf %133, %134 : vector<1x128xf32>
    %136 = vector.broadcast %135 : vector<1x128xf32> to vector<8x128xf32>
    %137 = arith.mulf %99, %136 : vector<8x128xf32>
    %138 = arith.addf %132, %137 : vector<8x128xf32>
    %139 = vector.extract_strided_slice %138 {offsets = [6, 0], sizes = [1, 128], strides = [1, 1]} : vector<8x128xf32> to vector<1x128xf32>
    %cst_37 = arith.constant 0.000000e+00 : f32
    %140 = vector.broadcast %cst_37 : f32 to vector<1x128xf32>
    %141 = arith.maximumf %139, %140 : vector<1x128xf32>
    %142 = vector.broadcast %141 : vector<1x128xf32> to vector<8x128xf32>
    %143 = arith.mulf %102, %142 : vector<8x128xf32>
    %144 = arith.addf %138, %143 : vector<8x128xf32>
    %cst_38 = arith.constant 0.000000e+00 : f32
    %145 = vector.broadcast %cst_38 : f32 to vector<8x128xf32>
    %146 = arith.maximumf %144, %145 : vector<8x128xf32>
    %c8_39 = arith.constant 8 : index
    %c0_40 = arith.constant 0 : index
    %147 = vector.load %arg8[%c8_39, %c0_40] : memref<48x128xf32, #tpu.memory_space<vmem>>, vector<8x128xf32>
    tpu.vector_store %arg8[%c8_39, %c0_40], %146 {strides = array<i32>} : memref<48x128xf32, #tpu.memory_space<vmem>>, vector<8x128xf32>,
    %c16 = arith.constant 16 : index
    %c0_41 = arith.constant 0 : index
    %148 = vector.load %arg7[%c16, %c0_41] : memref<32x128xf32, #tpu.memory_space<vmem>>, vector<8x128xf32>
    %c0_42 = arith.constant 0 : index
    %c16_43 = arith.constant 16 : index
    %c0_44 = arith.constant 0 : index
    %149 = vector.load %arg4[%c0_42, %c16_43, %c0_44] : memref<1x32x32xf32, #tpu.memory_space<vmem>>, vector<1x8x16xf32>
    %150 = vector.shape_cast %149 : vector<1x8x16xf32> to vector<8x16xf32>
    %c0_45 = arith.constant 0 : index
    %c0_46 = arith.constant 0 : index
    %151 = vector.load %arg8[%c0_45, %c0_46] : memref<48x128xf32, #tpu.memory_space<vmem>>, vector<16x128xf32>
    %cst_47 = arith.constant dense<0.000000e+00> : vector<8x128xf32>
    %152 = tpu.matmul %150, %151, %cst_47 {dimension_numbers = #tpu.dot_dimension_numbers<[1], [0], [0], [1], [0, 0, 1, 1], [], []>} : vector<8x16xf32>, vector<16x128xf32>, vector<8x128xf32> -> vector<8x128xf32>
    %153 = arith.addf %148, %152 : vector<8x128xf32>
    %c0_48 = arith.constant 0 : index
    %c16_49 = arith.constant 16 : index
    %c16_50 = arith.constant 16 : index
    %154 = vector.load %arg4[%c0_48, %c16_49, %c16_50] : memref<1x32x32xf32, #tpu.memory_space<vmem>>, vector<1x8x8xf32>
    %155 = vector.shape_cast %154 : vector<1x8x8xf32> to vector<8x8xf32>
    %156 = vector.extract_strided_slice %155 {offsets = [0, 0], sizes = [8, 1], strides = [1, 1]} : vector<8x8xf32> to vector<8x1xf32>
    %157 = vector.shape_cast %156 : vector<8x1xf32> to vector<8x1xf32>
    %158 = vector.broadcast %157 : vector<8x1xf32> to vector<8x128xf32>
    %159 = vector.extract_strided_slice %155 {offsets = [0, 1], sizes = [8, 1], strides = [1, 1]} : vector<8x8xf32> to vector<8x1xf32>
    %160 = vector.shape_cast %159 : vector<8x1xf32> to vector<8x1xf32>
    %161 = vector.broadcast %160 : vector<8x1xf32> to vector<8x128xf32>
    %162 = vector.extract_strided_slice %155 {offsets = [0, 2], sizes = [8, 1], strides = [1, 1]} : vector<8x8xf32> to vector<8x1xf32>
    %163 = vector.shape_cast %162 : vector<8x1xf32> to vector<8x1xf32>
    %164 = vector.broadcast %163 : vector<8x1xf32> to vector<8x128xf32>
    %165 = vector.extract_strided_slice %155 {offsets = [0, 3], sizes = [8, 1], strides = [1, 1]} : vector<8x8xf32> to vector<8x1xf32>
    %166 = vector.shape_cast %165 : vector<8x1xf32> to vector<8x1xf32>
    %167 = vector.broadcast %166 : vector<8x1xf32> to vector<8x128xf32>
    %168 = vector.extract_strided_slice %155 {offsets = [0, 4], sizes = [8, 1], strides = [1, 1]} : vector<8x8xf32> to vector<8x1xf32>
    %169 = vector.shape_cast %168 : vector<8x1xf32> to vector<8x1xf32>
    %170 = vector.broadcast %169 : vector<8x1xf32> to vector<8x128xf32>
    %171 = vector.extract_strided_slice %155 {offsets = [0, 5], sizes = [8, 1], strides = [1, 1]} : vector<8x8xf32> to vector<8x1xf32>
    %172 = vector.shape_cast %171 : vector<8x1xf32> to vector<8x1xf32>
    %173 = vector.broadcast %172 : vector<8x1xf32> to vector<8x128xf32>
    %174 = vector.extract_strided_slice %155 {offsets = [0, 6], sizes = [8, 1], strides = [1, 1]} : vector<8x8xf32> to vector<8x1xf32>
    %175 = vector.shape_cast %174 : vector<8x1xf32> to vector<8x1xf32>
    %176 = vector.broadcast %175 : vector<8x1xf32> to vector<8x128xf32>
    %177 = vector.extract_strided_slice %153 {offsets = [0, 0], sizes = [1, 128], strides = [1, 1]} : vector<8x128xf32> to vector<1x128xf32>
    %cst_51 = arith.constant 0.000000e+00 : f32
    %178 = vector.broadcast %cst_51 : f32 to vector<1x128xf32>
    %179 = arith.maximumf %177, %178 : vector<1x128xf32>
    %180 = vector.broadcast %179 : vector<1x128xf32> to vector<8x128xf32>
    %181 = arith.mulf %158, %180 : vector<8x128xf32>
    %182 = arith.addf %153, %181 : vector<8x128xf32>
    %183 = vector.extract_strided_slice %182 {offsets = [1, 0], sizes = [1, 128], strides = [1, 1]} : vector<8x128xf32> to vector<1x128xf32>
    %cst_52 = arith.constant 0.000000e+00 : f32
    %184 = vector.broadcast %cst_52 : f32 to vector<1x128xf32>
    %185 = arith.maximumf %183, %184 : vector<1x128xf32>
    %186 = vector.broadcast %185 : vector<1x128xf32> to vector<8x128xf32>
    %187 = arith.mulf %161, %186 : vector<8x128xf32>
    %188 = arith.addf %182, %187 : vector<8x128xf32>
    %189 = vector.extract_strided_slice %188 {offsets = [2, 0], sizes = [1, 128], strides = [1, 1]} : vector<8x128xf32> to vector<1x128xf32>
    %cst_53 = arith.constant 0.000000e+00 : f32
    %190 = vector.broadcast %cst_53 : f32 to vector<1x128xf32>
    %191 = arith.maximumf %189, %190 : vector<1x128xf32>
    %192 = vector.broadcast %191 : vector<1x128xf32> to vector<8x128xf32>
    %193 = arith.mulf %164, %192 : vector<8x128xf32>
    %194 = arith.addf %188, %193 : vector<8x128xf32>
    %195 = vector.extract_strided_slice %194 {offsets = [3, 0], sizes = [1, 128], strides = [1, 1]} : vector<8x128xf32> to vector<1x128xf32>
    %cst_54 = arith.constant 0.000000e+00 : f32
    %196 = vector.broadcast %cst_54 : f32 to vector<1x128xf32>
    %197 = arith.maximumf %195, %196 : vector<1x128xf32>
    %198 = vector.broadcast %197 : vector<1x128xf32> to vector<8x128xf32>
    %199 = arith.mulf %167, %198 : vector<8x128xf32>
    %200 = arith.addf %194, %199 : vector<8x128xf32>
    %201 = vector.extract_strided_slice %200 {offsets = [4, 0], sizes = [1, 128], strides = [1, 1]} : vector<8x128xf32> to vector<1x128xf32>
    %cst_55 = arith.constant 0.000000e+00 : f32
    %202 = vector.broadcast %cst_55 : f32 to vector<1x128xf32>
    %203 = arith.maximumf %201, %202 : vector<1x128xf32>
    %204 = vector.broadcast %203 : vector<1x128xf32> to vector<8x128xf32>
    %205 = arith.mulf %170, %204 : vector<8x128xf32>
    %206 = arith.addf %200, %205 : vector<8x128xf32>
    %207 = vector.extract_strided_slice %206 {offsets = [5, 0], sizes = [1, 128], strides = [1, 1]} : vector<8x128xf32> to vector<1x128xf32>
    %cst_56 = arith.constant 0.000000e+00 : f32
    %208 = vector.broadcast %cst_56 : f32 to vector<1x128xf32>
    %209 = arith.maximumf %207, %208 : vector<1x128xf32>
    %210 = vector.broadcast %209 : vector<1x128xf32> to vector<8x128xf32>
    %211 = arith.mulf %173, %210 : vector<8x128xf32>
    %212 = arith.addf %206, %211 : vector<8x128xf32>
    %213 = vector.extract_strided_slice %212 {offsets = [6, 0], sizes = [1, 128], strides = [1, 1]} : vector<8x128xf32> to vector<1x128xf32>
    %cst_57 = arith.constant 0.000000e+00 : f32
    %214 = vector.broadcast %cst_57 : f32 to vector<1x128xf32>
    %215 = arith.maximumf %213, %214 : vector<1x128xf32>
    %216 = vector.broadcast %215 : vector<1x128xf32> to vector<8x128xf32>
    %217 = arith.mulf %176, %216 : vector<8x128xf32>
    %218 = arith.addf %212, %217 : vector<8x128xf32>
    %cst_58 = arith.constant 0.000000e+00 : f32
    %219 = vector.broadcast %cst_58 : f32 to vector<8x128xf32>
    %220 = arith.maximumf %218, %219 : vector<8x128xf32>
    %c16_59 = arith.constant 16 : index
    %c0_60 = arith.constant 0 : index
    %221 = vector.load %arg8[%c16_59, %c0_60] : memref<48x128xf32, #tpu.memory_space<vmem>>, vector<8x128xf32>
    tpu.vector_store %arg8[%c16_59, %c0_60], %220 {strides = array<i32>} : memref<48x128xf32, #tpu.memory_space<vmem>>, vector<8x128xf32>,
    %c24 = arith.constant 24 : index
    %c0_61 = arith.constant 0 : index
    %222 = vector.load %arg7[%c24, %c0_61] : memref<32x128xf32, #tpu.memory_space<vmem>>, vector<8x128xf32>
    %c0_62 = arith.constant 0 : index
    %c24_63 = arith.constant 24 : index
    %c0_64 = arith.constant 0 : index
    %223 = vector.load %arg4[%c0_62, %c24_63, %c0_64] : memref<1x32x32xf32, #tpu.memory_space<vmem>>, vector<1x8x24xf32>
    %224 = vector.shape_cast %223 : vector<1x8x24xf32> to vector<8x24xf32>
    %c0_65 = arith.constant 0 : index
    %c0_66 = arith.constant 0 : index
    %225 = vector.load %arg8[%c0_65, %c0_66] : memref<48x128xf32, #tpu.memory_space<vmem>>, vector<24x128xf32>
    %cst_67 = arith.constant dense<0.000000e+00> : vector<8x128xf32>
    %226 = tpu.matmul %224, %225, %cst_67 {dimension_numbers = #tpu.dot_dimension_numbers<[1], [0], [0], [1], [0, 0, 1, 1], [], []>} : vector<8x24xf32>, vector<24x128xf32>, vector<8x128xf32> -> vector<8x128xf32>
    %227 = arith.addf %222, %226 : vector<8x128xf32>
    %c0_68 = arith.constant 0 : index
    %c24_69 = arith.constant 24 : index
    %c24_70 = arith.constant 24 : index
    %228 = vector.load %arg4[%c0_68, %c24_69, %c24_70] : memref<1x32x32xf32, #tpu.memory_space<vmem>>, vector<1x8x8xf32>
    %229 = vector.shape_cast %228 : vector<1x8x8xf32> to vector<8x8xf32>
    %230 = vector.extract_strided_slice %229 {offsets = [0, 0], sizes = [8, 1], strides = [1, 1]} : vector<8x8xf32> to vector<8x1xf32>
    %231 = vector.shape_cast %230 : vector<8x1xf32> to vector<8x1xf32>
    %232 = vector.broadcast %231 : vector<8x1xf32> to vector<8x128xf32>
    %233 = vector.extract_strided_slice %229 {offsets = [0, 1], sizes = [8, 1], strides = [1, 1]} : vector<8x8xf32> to vector<8x1xf32>
    %234 = vector.shape_cast %233 : vector<8x1xf32> to vector<8x1xf32>
    %235 = vector.broadcast %234 : vector<8x1xf32> to vector<8x128xf32>
    %236 = vector.extract_strided_slice %229 {offsets = [0, 2], sizes = [8, 1], strides = [1, 1]} : vector<8x8xf32> to vector<8x1xf32>
    %237 = vector.shape_cast %236 : vector<8x1xf32> to vector<8x1xf32>
    %238 = vector.broadcast %237 : vector<8x1xf32> to vector<8x128xf32>
    %239 = vector.extract_strided_slice %229 {offsets = [0, 3], sizes = [8, 1], strides = [1, 1]} : vector<8x8xf32> to vector<8x1xf32>
    %240 = vector.shape_cast %239 : vector<8x1xf32> to vector<8x1xf32>
    %241 = vector.broadcast %240 : vector<8x1xf32> to vector<8x128xf32>
    %242 = vector.extract_strided_slice %229 {offsets = [0, 4], sizes = [8, 1], strides = [1, 1]} : vector<8x8xf32> to vector<8x1xf32>
    %243 = vector.shape_cast %242 : vector<8x1xf32> to vector<8x1xf32>
    %244 = vector.broadcast %243 : vector<8x1xf32> to vector<8x128xf32>
    %245 = vector.extract_strided_slice %229 {offsets = [0, 5], sizes = [8, 1], strides = [1, 1]} : vector<8x8xf32> to vector<8x1xf32>
    %246 = vector.shape_cast %245 : vector<8x1xf32> to vector<8x1xf32>
    %247 = vector.broadcast %246 : vector<8x1xf32> to vector<8x128xf32>
    %248 = vector.extract_strided_slice %229 {offsets = [0, 6], sizes = [8, 1], strides = [1, 1]} : vector<8x8xf32> to vector<8x1xf32>
    %249 = vector.shape_cast %248 : vector<8x1xf32> to vector<8x1xf32>
    %250 = vector.broadcast %249 : vector<8x1xf32> to vector<8x128xf32>
    %251 = vector.extract_strided_slice %227 {offsets = [0, 0], sizes = [1, 128], strides = [1, 1]} : vector<8x128xf32> to vector<1x128xf32>
    %cst_71 = arith.constant 0.000000e+00 : f32
    %252 = vector.broadcast %cst_71 : f32 to vector<1x128xf32>
    %253 = arith.maximumf %251, %252 : vector<1x128xf32>
    %254 = vector.broadcast %253 : vector<1x128xf32> to vector<8x128xf32>
    %255 = arith.mulf %232, %254 : vector<8x128xf32>
    %256 = arith.addf %227, %255 : vector<8x128xf32>
    %257 = vector.extract_strided_slice %256 {offsets = [1, 0], sizes = [1, 128], strides = [1, 1]} : vector<8x128xf32> to vector<1x128xf32>
    %cst_72 = arith.constant 0.000000e+00 : f32
    %258 = vector.broadcast %cst_72 : f32 to vector<1x128xf32>
    %259 = arith.maximumf %257, %258 : vector<1x128xf32>
    %260 = vector.broadcast %259 : vector<1x128xf32> to vector<8x128xf32>
    %261 = arith.mulf %235, %260 : vector<8x128xf32>
    %262 = arith.addf %256, %261 : vector<8x128xf32>
    %263 = vector.extract_strided_slice %262 {offsets = [2, 0], sizes = [1, 128], strides = [1, 1]} : vector<8x128xf32> to vector<1x128xf32>
    %cst_73 = arith.constant 0.000000e+00 : f32
    %264 = vector.broadcast %cst_73 : f32 to vector<1x128xf32>
    %265 = arith.maximumf %263, %264 : vector<1x128xf32>
    %266 = vector.broadcast %265 : vector<1x128xf32> to vector<8x128xf32>
    %267 = arith.mulf %238, %266 : vector<8x128xf32>
    %268 = arith.addf %262, %267 : vector<8x128xf32>
    %269 = vector.extract_strided_slice %268 {offsets = [3, 0], sizes = [1, 128], strides = [1, 1]} : vector<8x128xf32> to vector<1x128xf32>
    %cst_74 = arith.constant 0.000000e+00 : f32
    %270 = vector.broadcast %cst_74 : f32 to vector<1x128xf32>
    %271 = arith.maximumf %269, %270 : vector<1x128xf32>
    %272 = vector.broadcast %271 : vector<1x128xf32> to vector<8x128xf32>
    %273 = arith.mulf %241, %272 : vector<8x128xf32>
    %274 = arith.addf %268, %273 : vector<8x128xf32>
    %275 = vector.extract_strided_slice %274 {offsets = [4, 0], sizes = [1, 128], strides = [1, 1]} : vector<8x128xf32> to vector<1x128xf32>
    %cst_75 = arith.constant 0.000000e+00 : f32
    %276 = vector.broadcast %cst_75 : f32 to vector<1x128xf32>
    %277 = arith.maximumf %275, %276 : vector<1x128xf32>
    %278 = vector.broadcast %277 : vector<1x128xf32> to vector<8x128xf32>
    %279 = arith.mulf %244, %278 : vector<8x128xf32>
    %280 = arith.addf %274, %279 : vector<8x128xf32>
    %281 = vector.extract_strided_slice %280 {offsets = [5, 0], sizes = [1, 128], strides = [1, 1]} : vector<8x128xf32> to vector<1x128xf32>
    %cst_76 = arith.constant 0.000000e+00 : f32
    %282 = vector.broadcast %cst_76 : f32 to vector<1x128xf32>
    %283 = arith.maximumf %281, %282 : vector<1x128xf32>
    %284 = vector.broadcast %283 : vector<1x128xf32> to vector<8x128xf32>
    %285 = arith.mulf %247, %284 : vector<8x128xf32>
    %286 = arith.addf %280, %285 : vector<8x128xf32>
    %287 = vector.extract_strided_slice %286 {offsets = [6, 0], sizes = [1, 128], strides = [1, 1]} : vector<8x128xf32> to vector<1x128xf32>
    %cst_77 = arith.constant 0.000000e+00 : f32
    %288 = vector.broadcast %cst_77 : f32 to vector<1x128xf32>
    %289 = arith.maximumf %287, %288 : vector<1x128xf32>
    %290 = vector.broadcast %289 : vector<1x128xf32> to vector<8x128xf32>
    %291 = arith.mulf %250, %290 : vector<8x128xf32>
    %292 = arith.addf %286, %291 : vector<8x128xf32>
    %cst_78 = arith.constant 0.000000e+00 : f32
    %293 = vector.broadcast %cst_78 : f32 to vector<8x128xf32>
    %294 = arith.maximumf %292, %293 : vector<8x128xf32>
    %c24_79 = arith.constant 24 : index
    %c0_80 = arith.constant 0 : index
    %295 = vector.load %arg8[%c24_79, %c0_80] : memref<48x128xf32, #tpu.memory_space<vmem>>, vector<8x128xf32>
    tpu.vector_store %arg8[%c24_79, %c0_80], %294 {strides = array<i32>} : memref<48x128xf32, #tpu.memory_space<vmem>>, vector<8x128xf32>,
    %c0_81 = arith.constant 0 : index
    %c0_82 = arith.constant 0 : index
    %296 = vector.load %arg5[%c0_81, %c0_82] : memref<8x48xf32, #tpu.memory_space<vmem>>, vector<8x48xf32>
    %c0_83 = arith.constant 0 : index
    %c0_84 = arith.constant 0 : index
    %297 = vector.load %arg8[%c0_83, %c0_84] : memref<48x128xf32, #tpu.memory_space<vmem>>, vector<48x128xf32>
    %cst_85 = arith.constant dense<0.000000e+00> : vector<8x128xf32>
    %298 = tpu.matmul %296, %297, %cst_85 {dimension_numbers = #tpu.dot_dimension_numbers<[1], [0], [0], [1], [0, 0, 1, 1], [], []>} : vector<8x48xf32>, vector<48x128xf32>, vector<8x128xf32> -> vector<8x128xf32>
    %c0_86 = arith.constant 0 : index
    %c0_87 = arith.constant 0 : index
    %299 = vector.load %arg6[%c0_86, %c0_87] : memref<8x128xf32, #tpu.memory_space<vmem>>, vector<8x128xf32>
    tpu.vector_store %arg6[%c0_86, %c0_87], %298 {strides = array<i32>} : memref<8x128xf32, #tpu.memory_space<vmem>>, vector<8x128xf32>,
    return
  }
  func.func @transform_0(%arg0: i32) -> (i32, i32) {
    %c0_i32 = arith.constant 0 : i32
    %c0_i32_0 = arith.constant 0 : i32
    return %c0_i32, %arg0 : i32, i32
  }
  func.func @transform_1(%arg0: i32) -> (i32, i32) {
    %c0_i32 = arith.constant 0 : i32
    %c0_i32_0 = arith.constant 0 : i32
    %c0_i32_1 = arith.constant 0 : i32
    return %c0_i32, %c0_i32_0 : i32, i32
  }
  func.func @transform_2(%arg0: i32) -> (i32, i32) {
    %c0_i32 = arith.constant 0 : i32
    %c0_i32_0 = arith.constant 0 : i32
    %c0_i32_1 = arith.constant 0 : i32
    return %c0_i32, %c0_i32_0 : i32, i32
  }
  func.func @transform_3(%arg0: i32) -> (i32, i32, i32) {
    %c0_i32 = arith.constant 0 : i32
    %c0_i32_0 = arith.constant 0 : i32
    %c0_i32_1 = arith.constant 0 : i32
    %c0_i32_2 = arith.constant 0 : i32
    return %c0_i32, %c0_i32_0, %c0_i32_1 : i32, i32, i32
  }
  func.func @transform_4(%arg0: i32) -> (i32, i32) {
    %c0_i32 = arith.constant 0 : i32
    %c0_i32_0 = arith.constant 0 : i32
    %c0_i32_1 = arith.constant 0 : i32
    return %c0_i32, %c0_i32_0 : i32, i32
  }
  func.func @transform_5(%arg0: i32) -> (i32, i32) {
    %c0_i32 = arith.constant 0 : i32
    %c0_i32_0 = arith.constant 0 : i32
    return %c0_i32, %arg0 : i32, i32
  }
}

</mosaic_0001>

<llo_original>
// kernel: tpu_custom_call.1
$region0: #{tpu_custom_call.1}
  #allocation0 [shape = 'u32[]', space=smem, size = 0x4, offset = 0x4, fixed_abs, tag = 'smem constant byte address 0x4 - core index']
  #allocation1 [shape = 'u32[144,128]{1,0:T(1,128)}', space=vmem, size = 0x12000, scoped, tag = 'internal scratch']
  #allocation2 [shape = 'f32[32,128]{1,0:T(8,128)}', space=vmem, size = 0x4000, scoped, tag = 'scratch operand']
  #allocation3 [shape = 'f32[48,128]{1,0:T(8,128)}', space=vmem, size = 0x6000, scoped, tag = 'scratch operand']
  %s0 = inlined_call_operand.vmem [shape: f32[16,128], index: 0, kind: input, shape index: {}]
  %s1 = inlined_call_operand.vmem [shape: f32[32,16], index: 1, kind: input, shape index: {}]
  %s2 = inlined_call_operand.vmem [shape: f32[32,32], index: 2, kind: input, shape index: {}]
  %s3 = inlined_call_operand.hbm [shape: f32[1,32,32], index: 3, kind: input, shape index: {}]
  %s4 = inlined_call_operand.vmem [shape: f32[8,48], index: 4, kind: input, shape index: {}]
  %s5 = inlined_call_operand.hbm [shape: f32[8,128], index: 5, kind: output, shape index: {}]
  %s6 = sld [smem:[#allocation0]]
  $region34: #{tpu_custom_call.1} parent=0
    _
  %s8 = ssub.s32 1, %s6
  %s9 = scalar_select 0, %s8, %s6
  $region1: #{tpu_custom_call.1} parent=0
    #allocation4 [shape = 'u8[16384]{0}', space=vmem, size = 0x4000, scoped, tag = 'input window, operand 3, single buffered']
    #allocation5 [shape = 's32[1]{0}', space=sflag, size = 0x4, scoped, tag = 'scoped memory for tpu_custom_call.1']
    #allocation6 [shape = 's32[1]{0}', space=sflag, size = 0x4, scoped, tag = 'scoped memory for tpu_custom_call.1']
    #allocation7 [shape = 'u8[4096]{0}', space=vmem, size = 0x1000, scoped, tag = 'output window, operand 0, single buffered']
    %10 = vsyncpa [#allocation5], 0
    %11 = vsyncpa [#allocation6], 0
    // Predicated region
    $region2: #{tpu_custom_call.1} parent=1 // pred_check
      _
    $region3: #{tpu_custom_call.1} parent=1 // pred_check_branch
      %13 = sbr.rel (0) target = $region5
    $region4: #{tpu_custom_call.1} parent=1 // pred_region
      _
    $region5: #{tpu_custom_call.1} parent=1 // pred_fallthru
      _
    // Predicated region
    $region6: #{tpu_custom_call.1} parent=1 // pred_check
      _
    $region7: #{tpu_custom_call.1} parent=1 // pred_check_branch
      %15 = sbr.rel (0) target = $region9
    $region8: #{tpu_custom_call.1} parent=1 // pred_region
      _
    $region9: #{tpu_custom_call.1} parent=1 // pred_fallthru
      _
    // Predicated region
    $region10: #{tpu_custom_call.1} parent=1 // pred_check
      _
    $region11: #{tpu_custom_call.1} parent=1 // pred_check_branch
      %17 = sbr.rel (0) target = $region13
    $region12: #{tpu_custom_call.1} parent=1 // pred_region
      _
    $region13: #{tpu_custom_call.1} parent=1 // pred_fallthru
      _
    // Predicated region
    $region14: #{tpu_custom_call.1} parent=1 // pred_check
      _
    $region15: #{tpu_custom_call.1} parent=1 // pred_check_branch
      %19 = sbr.rel (0) target = $region17
    $region16: #{tpu_custom_call.1} parent=1 // pred_region
      %s21 = ssub.s32 512, 512
      %22 = vsyncadd [#allocation5], %s21
      %s23 = sshll.u32 [#allocation4], 4
      %s24 = int_to_ptr.vmem [resolvable:$true] %s23
      %29 = dma.hbm_to_vmem [thread:$0]  %s3, 512, %s24, [#allocation5], 128, 128, 8
    $region17: #{tpu_custom_call.1} parent=1 // pred_fallthru
      _
    // Predicated region
    $region18: #{tpu_custom_call.1} parent=1 // pred_check
      _
    $region19: #{tpu_custom_call.1} parent=1 // pred_check_branch
      %31 = sbr.rel (0) target = $region21
    $region20: #{tpu_custom_call.1} parent=1 // pred_region
      _
    $region21: #{tpu_custom_call.1} parent=1 // pred_fallthru
      _
    // Predicated region
    $region22: #{tpu_custom_call.1} parent=1 // pred_check
      _
    $region23: #{tpu_custom_call.1} parent=1 // pred_check_branch
      %33 = sbr.rel (0) target = $region25
    $region24: #{tpu_custom_call.1} parent=1 // pred_region
      %34 = dma.done [#allocation5], 512
    $region25: #{tpu_custom_call.1} parent=1 // pred_fallthru
      _
    %v35 = vld [vmem:[%s0] sm:$0xff]
    %v36 = vld [vmem:[%s0 + $0x8] sm:$0xff]
    %37 = vst [vmem:[#allocation3 + $0x20] sm:$0xff] %v35
    %38 = vst [vmem:[#allocation3 + $0x28] sm:$0xff] %v36
    %v39 = vld [vmem:[%s1] sm:$0xff]
    %v40 = vld [vmem:[%s1 + $0x8] sm:$0xff]
    %v41 = vld [vmem:[%s1 + $0x10] sm:$0xff]
    %v42 = vld [vmem:[%s1 + $0x18] sm:$0xff]
    %vm43 = vcmask 130048
    %v45 = vsel %vm43, %v39, 0
    %v48 = vsel %vm43, %v40, 0
    %v51 = vsel %vm43, %v41, 0
    %v54 = vsel %vm43, %v42, 0
    %56 = vmatprep.subr.mxu0 0.0
    %57 = vmatpush1.msra.mxu0 %v35
    %58 = vmatprep.subr.mxu0 0.0
    %59 = vmatpush1.msra.mxu0 %v36
    %60 = vmatprep.subr.mxu0 0.0
    %61 = vmatpush1.msra.mxu0 0.0
    %62 = vmatprep.subr.mxu0 0.0
    %63 = vmatpush1.msra.mxu0 0.0
    %64 = vmatprep.subr.mxu0 0.0
    %65 = vmatpush1.msra.mxu0 0.0
    %66 = vmatprep.subr.mxu0 0.0
    %67 = vmatpush1.msra.mxu0 0.0
    %68 = vmatprep.subr.mxu0 0.0
    %69 = vmatpush1.msra.mxu0 0.0
    %70 = vmatprep.subr.mxu0 0.0
    %71 = vmatpush1.msra.mxu0 0.0
    %72 = vmatprep.subr.mxu0 0.0
    %73 = vmatpush1.msra.mxu0 0.0
    %74 = vmatprep.subr.mxu0 0.0
    %75 = vmatpush1.msra.mxu0 0.0
    %76 = vmatprep.subr.mxu0 0.0
    %77 = vmatpush1.msra.mxu0 0.0
    %78 = vmatprep.subr.mxu0 0.0
    %79 = vmatpush1.msra.mxu0 0.0
    %80 = vmatprep.subr.mxu0 0.0
    %81 = vmatpush1.msra.mxu0 0.0
    %82 = vmatprep.subr.mxu0 0.0
    %83 = vmatpush1.msra.mxu0 0.0
    %84 = vmatprep.subr.mxu0 0.0
    %85 = vmatpush1.msra.mxu0 0.0
    %86 = vmatprep.subr.mxu0 0.0
    %87 = vmatpush1.msra.mxu0 0.0
    %88 = vmatprep.subr.mxu0 0.0
    %89 = vmatpush1.msra.mxu0 0.0
    %90 = vmatprep.subr.mxu0 0.0
    %91 = vmatpush1.msra.mxu0 0.0
    %92 = vmatprep.subr.mxu0 0.0
    %93 = vmatpush1.msra.mxu0 0.0
    %94 = vmatprep.subr.mxu0 0.0
    %95 = vmatpush1.msra.mxu0 0.0
    %96 = vmatprep.subr.mxu0 0.0
    %97 = vmatpush1.msra.mxu0 0.0
    %98 = vmatprep.subr.mxu0 0.0
    %99 = vmatpush1.msra.mxu0 0.0
    %100 = vmatprep.subr.mxu0 0.0
    %101 = vmatpush1.msra.mxu0 0.0
    %102 = vmatprep.subr.mxu0 0.0
    %103 = vmatpush1.msra.mxu0 0.0
    %104 = vmatprep.subr.mxu0 0.0
    %105 = vmatpush1.msra.mxu0 0.0
    %106 = vmatprep.subr.mxu0 0.0
    %107 = vmatpush1.msra.mxu0 0.0
    %108 = vmatprep.subr.mxu0 0.0
    %109 = vmatpush1.msra.mxu0 0.0
    %110 = vmatprep.subr.mxu0 0.0
    %111 = vmatpush1.msra.mxu0 0.0
    %112 = vmatprep.subr.mxu0 0.0
    %113 = vmatpush1.msra.mxu0 0.0
    %114 = vmatprep.subr.mxu0 0.0
    %115 = vmatpush1.msra.mxu0 0.0
    %116 = vmatprep.subr.mxu0 0.0
    %117 = vmatpush1.msra.mxu0 0.0
    %118 = vmatprep.subr.mxu0 0.0
    %119 = vmatpush1.msra.mxu0 0.0
    %120 = vmatprep.mubr.f32.mxu0 0.0
    %121 = vmatmul.mubr.f32.gmra.mrb[0].mxu0 %v45
    %v122 = vpop.f32.mrb[0].mxu0
    %v123 = vadd.f32 0.0, %v122
    %v124 = vpop.f32.mrb[0].mxu0
    %125 = vmatprep.mubr.f32.mxu0 0.0
    %126 = vmatmul.mubr.f32.gmra.mrb[0].mxu0 %v48
    %v127 = vpop.f32.mrb[0].mxu0
    %v128 = vadd.f32 0.0, %v127
    %v129 = vpop.f32.mrb[0].mxu0
    %130 = vmatprep.mubr.f32.mxu0 0.0
    %131 = vmatmul.mubr.f32.gmra.mrb[0].mxu0 %v51
    %v132 = vpop.f32.mrb[0].mxu0
    %v133 = vadd.f32 0.0, %v132
    %v134 = vpop.f32.mrb[0].mxu0
    %135 = vmatprep.mubr.f32.mxu0 0.0
    %136 = vmatmul.mubr.f32.gmra.mrb[0].mxu0 %v54
    %v137 = vpop.f32.mrb[0].mxu0
    %v138 = vadd.f32 0.0, %v137
    %v139 = vpop.f32.mrb[0].mxu0
    %140 = vdwg.mxu0
    %141 = vst [vmem:[#allocation2] sm:$0xff] %v123
    %142 = vst [vmem:[#allocation2 + $0x8] sm:$0xff] %v128
    %143 = vst [vmem:[#allocation2 + $0x10] sm:$0xff] %v133
    %144 = vst [vmem:[#allocation2 + $0x18] sm:$0xff] %v138
    %v145 = vld [vmem:[#allocation2] sm:$0xff]
    %v146 = vld [vmem:[#allocation4] sm:$0xff]
    %148 = vset.pattern.permute.xlu0 0
    %149 = vperm.xlu0 %148, %v146
    %v150 = vpop.permute.xlu0 %149
    %152 = vset.pattern.permute.xlu0 1
    %153 = vperm.xlu0 %152, %v146
    %v154 = vpop.permute.xlu0 %153
    %156 = vset.pattern.permute.xlu0 2
    %157 = vperm.xlu0 %156, %v146
    %v158 = vpop.permute.xlu0 %157
    %160 = vset.pattern.permute.xlu0 3
    %161 = vperm.xlu0 %160, %v146
    %v162 = vpop.permute.xlu0 %161
    %164 = vset.pattern.permute.xlu0 4
    %165 = vperm.xlu0 %164, %v146
    %v166 = vpop.permute.xlu0 %165
    %168 = vset.pattern.permute.xlu0 5
    %169 = vperm.xlu0 %168, %v146
    %v170 = vpop.permute.xlu0 %169
    %172 = vset.pattern.permute.xlu0 6
    %173 = vperm.xlu0 %172, %v146
    %v174 = vpop.permute.xlu0 %173
    %v176 = vmax.f32 %v145, 0.0
    %v177 = vlaneseq
    %v178 = vshrl.u32 %v177, 7
    %v179 = vsub.s32 0, %v178
    %v180 = vrot.slane %v176, %v179
    %v181 = vmul.f32 %v150, %v180
    %v182 = vadd.f32 %v145, %v181
    %v183 = vmax.f32 %v182, 0.0
    %v184 = vlaneseq
    %v185 = vshrl.u32 %v184, 7
    %v186 = vsub.s32 1, %v185
    %v187 = vrot.slane %v183, %v186
    %v188 = vmul.f32 %v154, %v187
    %v189 = vadd.f32 %v182, %v188
    %v190 = vmax.f32 %v189, 0.0
    %v191 = vlaneseq
    %v192 = vshrl.u32 %v191, 7
    %v193 = vsub.s32 2, %v192
    %v194 = vrot.slane %v190, %v193
    %v195 = vmul.f32 %v158, %v194
    %v196 = vadd.f32 %v189, %v195
    %v197 = vmax.f32 %v196, 0.0
    %v198 = vlaneseq
    %v199 = vshrl.u32 %v198, 7
    %v200 = vsub.s32 3, %v199
    %v201 = vrot.slane %v197, %v200
    %v202 = vmul.f32 %v162, %v201
    %v203 = vadd.f32 %v196, %v202
    %v204 = vmax.f32 %v203, 0.0
    %v205 = vlaneseq
    %v206 = vshrl.u32 %v205, 7
    %v207 = vsub.s32 4, %v206
    %v208 = vrot.slane %v204, %v207
    %v209 = vmul.f32 %v166, %v208
    %v210 = vadd.f32 %v203, %v209
    %v211 = vmax.f32 %v210, 0.0
    %v212 = vlaneseq
    %v213 = vshrl.u32 %v212, 7
    %v214 = vsub.s32 5, %v213
    %v215 = vrot.slane %v211, %v214
    %v216 = vmul.f32 %v170, %v215
    %v217 = vadd.f32 %v210, %v216
    %v218 = vmax.f32 %v217, 0.0
    %v219 = vlaneseq
    %v220 = vshrl.u32 %v219, 7
    %v221 = vsub.s32 6, %v220
    %v222 = vrot.slane %v218, %v221
    %v223 = vmul.f32 %v174, %v222
    %v224 = vadd.f32 %v217, %v223
    %v225 = vmax.f32 %v224, 0.0
    %226 = vst [vmem:[#allocation3] sm:$0xff] %v225
    %v227 = vld [vmem:[#allocation2 + $0x8] sm:$0xff]
    %v228 = vld [vmem:[#allocation4 + $0x8] sm:$0xff]
    %v229 = vld [vmem:[#allocation3] sm:$0xff]
    %vm230 = vcmask 64512
    %v232 = vsel %vm230, %v228, 0
    %234 = vmatprep.subr.mxu0 0.0
    %235 = vmatpush1.msra.mxu0 %v229
    %236 = vmatprep.subr.mxu0 0.0
    %237 = vmatpush1.msra.mxu0 0.0
    %238 = vmatprep.subr.mxu0 0.0
    %239 = vmatpush1.msra.mxu0 0.0
    %240 = vmatprep.subr.mxu0 0.0
    %241 = vmatpush1.msra.mxu0 0.0
    %242 = vmatprep.subr.mxu0 0.0
    %243 = vmatpush1.msra.mxu0 0.0
    %244 = vmatprep.subr.mxu0 0.0
    %245 = vmatpush1.msra.mxu0 0.0
    %246 = vmatprep.subr.mxu0 0.0
    %247 = vmatpush1.msra.mxu0 0.0
    %248 = vmatprep.subr.mxu0 0.0
    %249 = vmatpush1.msra.mxu0 0.0
    %250 = vmatprep.subr.mxu0 0.0
    %251 = vmatpush1.msra.mxu0 0.0
    %252 = vmatprep.subr.mxu0 0.0
    %253 = vmatpush1.msra.mxu0 0.0
    %254 = vmatprep.subr.mxu0 0.0
    %255 = vmatpush1.msra.mxu0 0.0
    %256 = vmatprep.subr.mxu0 0.0
    %257 = vmatpush1.msra.mxu0 0.0
    %258 = vmatprep.subr.mxu0 0.0
    %259 = vmatpush1.msra.mxu0 0.0
    %260 = vmatprep.subr.mxu0 0.0
    %261 = vmatpush1.msra.mxu0 0.0
    %262 = vmatprep.subr.mxu0 0.0
    %263 = vmatpush1.msra.mxu0 0.0
    %264 = vmatprep.subr.mxu0 0.0
    %265 = vmatpush1.msra.mxu0 0.0
    %266 = vmatprep.subr.mxu0 0.0
    %267 = vmatpush1.msra.mxu0 0.0
    %268 = vmatprep.subr.mxu0 0.0
    %269 = vmatpush1.msra.mxu0 0.0
    %270 = vmatprep.subr.mxu0 0.0
    %271 = vmatpush1.msra.mxu0 0.0
    %272 = vmatprep.subr.mxu0 0.0
    %273 = vmatpush1.msra.mxu0 0.0
    %274 = vmatprep.subr.mxu0 0.0
    %275 = vmatpush1.msra.mxu0 0.0
    %276 = vmatprep.subr.mxu0 0.0
    %277 = vmatpush1.msra.mxu0 0.0
    %278 = vmatprep.subr.mxu0 0.0
    %279 = vmatpush1.msra.mxu0 0.0
    %280 = vmatprep.subr.mxu0 0.0
    %281 = vmatpush1.msra.mxu0 0.0
    %282 = vmatprep.subr.mxu0 0.0
    %283 = vmatpush1.msra.mxu0 0.0
    %284 = vmatprep.subr.mxu0 0.0
    %285 = vmatpush1.msra.mxu0 0.0
    %286 = vmatprep.subr.mxu0 0.0
    %287 = vmatpush1.msra.mxu0 0.0
    %288 = vmatprep.subr.mxu0 0.0
    %289 = vmatpush1.msra.mxu0 0.0
    %290 = vmatprep.subr.mxu0 0.0
    %291 = vmatpush1.msra.mxu0 0.0
    %292 = vmatprep.subr.mxu0 0.0
    %293 = vmatpush1.msra.mxu0 0.0
    %294 = vmatprep.subr.mxu0 0.0
    %295 = vmatpush1.msra.mxu0 0.0
    %296 = vmatprep.subr.mxu0 0.0
    %297 = vmatpush1.msra.mxu0 0.0
    %298 = vmatprep.mubr.f32.mxu0 0.0
    %299 = vmatmul.mubr.f32.gmra.mrb[0].mxu0 %v232
    %v300 = vpop.f32.mrb[0].mxu0
    %v301 = vadd.f32 0.0, %v300
    %v302 = vpop.f32.mrb[0].mxu0
    %303 = vdwg.mxu0
    %v304 = vadd.f32 %v227, %v301
    %305 = vset.pattern.permute.xlu0 8
    %306 = vperm.xlu0 %305, %v228
    %v307 = vpop.permute.xlu0 %306
    %309 = vset.pattern.permute.xlu0 9
    %310 = vperm.xlu0 %309, %v228
    %v311 = vpop.permute.xlu0 %310
    %313 = vset.pattern.permute.xlu0 10
    %314 = vperm.xlu0 %313, %v228
    %v315 = vpop.permute.xlu0 %314
    %317 = vset.pattern.permute.xlu0 11
    %318 = vperm.xlu0 %317, %v228
    %v319 = vpop.permute.xlu0 %318
    %321 = vset.pattern.permute.xlu0 12
    %322 = vperm.xlu0 %321, %v228
    %v323 = vpop.permute.xlu0 %322
    %325 = vset.pattern.permute.xlu0 13
    %326 = vperm.xlu0 %325, %v228
    %v327 = vpop.permute.xlu0 %326
    %329 = vset.pattern.permute.xlu0 14
    %330 = vperm.xlu0 %329, %v228
    %v331 = vpop.permute.xlu0 %330
    %v333 = vmax.f32 %v304, 0.0
    %v334 = vlaneseq
    %v335 = vshrl.u32 %v334, 7
    %v336 = vsub.s32 0, %v335
    %v337 = vrot.slane %v333, %v336
    %v338 = vmul.f32 %v307, %v337
    %v339 = vadd.f32 %v304, %v338
    %v340 = vmax.f32 %v339, 0.0
    %v341 = vlaneseq
    %v342 = vshrl.u32 %v341, 7
    %v343 = vsub.s32 1, %v342
    %v344 = vrot.slane %v340, %v343
    %v345 = vmul.f32 %v311, %v344
    %v346 = vadd.f32 %v339, %v345
    %v347 = vmax.f32 %v346, 0.0
    %v348 = vlaneseq
    %v349 = vshrl.u32 %v348, 7
    %v350 = vsub.s32 2, %v349
    %v351 = vrot.slane %v347, %v350
    %v352 = vmul.f32 %v315, %v351
    %v353 = vadd.f32 %v346, %v352
    %v354 = vmax.f32 %v353, 0.0
    %v355 = vlaneseq
    %v356 = vshrl.u32 %v355, 7
    %v357 = vsub.s32 3, %v356
    %v358 = vrot.slane %v354, %v357
    %v359 = vmul.f32 %v319, %v358
    %v360 = vadd.f32 %v353, %v359
    %v361 = vmax.f32 %v360, 0.0
    %v362 = vlaneseq
    %v363 = vshrl.u32 %v362, 7
    %v364 = vsub.s32 4, %v363
    %v365 = vrot.slane %v361, %v364
    %v366 = vmul.f32 %v323, %v365
    %v367 = vadd.f32 %v360, %v366
    %v368 = vmax.f32 %v367, 0.0
    %v369 = vlaneseq
    %v370 = vshrl.u32 %v369, 7
    %v371 = vsub.s32 5, %v370
    %v372 = vrot.slane %v368, %v371
    %v373 = vmul.f32 %v327, %v372
    %v374 = vadd.f32 %v367, %v373
    %v375 = vmax.f32 %v374, 0.0
    %v376 = vlaneseq
    %v377 = vshrl.u32 %v376, 7
    %v378 = vsub.s32 6, %v377
    %v379 = vrot.slane %v375, %v378
    %v380 = vmul.f32 %v331, %v379
    %v381 = vadd.f32 %v374, %v380
    %v382 = vmax.f32 %v381, 0.0
    %383 = vst [vmem:[#allocation3 + $0x8] sm:$0xff] %v382
    %v384 = vld [vmem:[#allocation2 + $0x10] sm:$0xff]
    %v385 = vld [vmem:[#allocation4 + $0x10] sm:$0xff]
    %v386 = vld [vmem:[#allocation3] sm:$0xff]
    %v387 = vld [vmem:[#allocation3 + $0x8] sm:$0xff]
    %v389 = vsel %vm43, %v385, 0
    %391 = vmatprep.subr.mxu0 0.0
    %392 = vmatpush1.msra.mxu0 %v386
    %393 = vmatprep.subr.mxu0 0.0
    %394 = vmatpush1.msra.mxu0 %v387
    %395 = vmatprep.subr.mxu0 0.0
    %396 = vmatpush1.msra.mxu0 0.0
    %397 = vmatprep.subr.mxu0 0.0
    %398 = vmatpush1.msra.mxu0 0.0
    %399 = vmatprep.subr.mxu0 0.0
    %400 = vmatpush1.msra.mxu0 0.0
    %401 = vmatprep.subr.mxu0 0.0
    %402 = vmatpush1.msra.mxu0 0.0
    %403 = vmatprep.subr.mxu0 0.0
    %404 = vmatpush1.msra.mxu0 0.0
    %405 = vmatprep.subr.mxu0 0.0
    %406 = vmatpush1.msra.mxu0 0.0
    %407 = vmatprep.subr.mxu0 0.0
    %408 = vmatpush1.msra.mxu0 0.0
    %409 = vmatprep.subr.mxu0 0.0
    %410 = vmatpush1.msra.mxu0 0.0
    %411 = vmatprep.subr.mxu0 0.0
    %412 = vmatpush1.msra.mxu0 0.0
    %413 = vmatprep.subr.mxu0 0.0
    %414 = vmatpush1.msra.mxu0 0.0
    %415 = vmatprep.subr.mxu0 0.0
    %416 = vmatpush1.msra.mxu0 0.0
    %417 = vmatprep.subr.mxu0 0.0
    %418 = vmatpush1.msra.mxu0 0.0
    %419 = vmatprep.subr.mxu0 0.0
    %420 = vmatpush1.msra.mxu0 0.0
    %421 = vmatprep.subr.mxu0 0.0
    %422 = vmatpush1.msra.mxu0 0.0
    %423 = vmatprep.subr.mxu0 0.0
    %424 = vmatpush1.msra.mxu0 0.0
    %425 = vmatprep.subr.mxu0 0.0
    %426 = vmatpush1.msra.mxu0 0.0
    %427 = vmatprep.subr.mxu0 0.0
    %428 = vmatpush1.msra.mxu0 0.0
    %429 = vmatprep.subr.mxu0 0.0
    %430 = vmatpush1.msra.mxu0 0.0
    %431 = vmatprep.subr.mxu0 0.0
    %432 = vmatpush1.msra.mxu0 0.0
    %433 = vmatprep.subr.mxu0 0.0
    %434 = vmatpush1.msra.mxu0 0.0
    %435 = vmatprep.subr.mxu0 0.0
    %436 = vmatpush1.msra.mxu0 0.0
    %437 = vmatprep.subr.mxu0 0.0
    %438 = vmatpush1.msra.mxu0 0.0
    %439 = vmatprep.subr.mxu0 0.0
    %440 = vmatpush1.msra.mxu0 0.0
    %441 = vmatprep.subr.mxu0 0.0
    %442 = vmatpush1.msra.mxu0 0.0
    %443 = vmatprep.subr.mxu0 0.0
    %444 = vmatpush1.msra.mxu0 0.0
    %445 = vmatprep.subr.mxu0 0.0
    %446 = vmatpush1.msra.mxu0 0.0
    %447 = vmatprep.subr.mxu0 0.0
    %448 = vmatpush1.msra.mxu0 0.0
    %449 = vmatprep.subr.mxu0 0.0
    %450 = vmatpush1.msra.mxu0 0.0
    %451 = vmatprep.subr.mxu0 0.0
    %452 = vmatpush1.msra.mxu0 0.0
    %453 = vmatprep.subr.mxu0 0.0
    %454 = vmatpush1.msra.mxu0 0.0
    %455 = vmatprep.mubr.f32.mxu0 0.0
    %456 = vmatmul.mubr.f32.gmra.mrb[0].mxu0 %v389
    %v457 = vpop.f32.mrb[0].mxu0
    %v458 = vadd.f32 0.0, %v457
    %v459 = vpop.f32.mrb[0].mxu0
    %460 = vdwg.mxu0
    %v461 = vadd.f32 %v384, %v458
    %462 = vset.pattern.permute.xlu0 16
    %463 = vperm.xlu0 %462, %v385
    %v464 = vpop.permute.xlu0 %463
    %466 = vset.pattern.permute.xlu0 17
    %467 = vperm.xlu0 %466, %v385
    %v468 = vpop.permute.xlu0 %467
    %470 = vset.pattern.permute.xlu0 18
    %471 = vperm.xlu0 %470, %v385
    %v472 = vpop.permute.xlu0 %471
    %474 = vset.pattern.permute.xlu0 19
    %475 = vperm.xlu0 %474, %v385
    %v476 = vpop.permute.xlu0 %475
    %478 = vset.pattern.permute.xlu0 20
    %479 = vperm.xlu0 %478, %v385
    %v480 = vpop.permute.xlu0 %479
    %482 = vset.pattern.permute.xlu0 21
    %483 = vperm.xlu0 %482, %v385
    %v484 = vpop.permute.xlu0 %483
    %486 = vset.pattern.permute.xlu0 22
    %487 = vperm.xlu0 %486, %v385
    %v488 = vpop.permute.xlu0 %487
    %v490 = vmax.f32 %v461, 0.0
    %v491 = vlaneseq
    %v492 = vshrl.u32 %v491, 7
    %v493 = vsub.s32 0, %v492
    %v494 = vrot.slane %v490, %v493
    %v495 = vmul.f32 %v464, %v494
    %v496 = vadd.f32 %v461, %v495
    %v497 = vmax.f32 %v496, 0.0
    %v498 = vlaneseq
    %v499 = vshrl.u32 %v498, 7
    %v500 = vsub.s32 1, %v499
    %v501 = vrot.slane %v497, %v500
    %v502 = vmul.f32 %v468, %v501
    %v503 = vadd.f32 %v496, %v502
    %v504 = vmax.f32 %v503, 0.0
    %v505 = vlaneseq
    %v506 = vshrl.u32 %v505, 7
    %v507 = vsub.s32 2, %v506
    %v508 = vrot.slane %v504, %v507
    %v509 = vmul.f32 %v472, %v508
    %v510 = vadd.f32 %v503, %v509
    %v511 = vmax.f32 %v510, 0.0
    %v512 = vlaneseq
    %v513 = vshrl.u32 %v512, 7
    %v514 = vsub.s32 3, %v513
    %v515 = vrot.slane %v511, %v514
    %v516 = vmul.f32 %v476, %v515
    %v517 = vadd.f32 %v510, %v516
    %v518 = vmax.f32 %v517, 0.0
    %v519 = vlaneseq
    %v520 = vshrl.u32 %v519, 7
    %v521 = vsub.s32 4, %v520
    %v522 = vrot.slane %v518, %v521
    %v523 = vmul.f32 %v480, %v522
    %v524 = vadd.f32 %v517, %v523
    %v525 = vmax.f32 %v524, 0.0
    %v526 = vlaneseq
    %v527 = vshrl.u32 %v526, 7
    %v528 = vsub.s32 5, %v527
    %v529 = vrot.slane %v525, %v528
    %v530 = vmul.f32 %v484, %v529
    %v531 = vadd.f32 %v524, %v530
    %v532 = vmax.f32 %v531, 0.0
    %v533 = vlaneseq
    %v534 = vshrl.u32 %v533, 7
    %v535 = vsub.s32 6, %v534
    %v536 = vrot.slane %v532, %v535
    %v537 = vmul.f32 %v488, %v536
    %v538 = vadd.f32 %v531, %v537
    %v539 = vmax.f32 %v538, 0.0
    %540 = vst [vmem:[#allocation3 + $0x10] sm:$0xff] %v539
    %v541 = vld [vmem:[#allocation2 + $0x18] sm:$0xff]
    %v542 = vld [vmem:[#allocation4 + $0x18] sm:$0xff]
    %v543 = vld [vmem:[#allocation3] sm:$0xff]
    %v544 = vld [vmem:[#allocation3 + $0x8] sm:$0xff]
    %v545 = vld [vmem:[#allocation3 + $0x10] sm:$0xff]
    %vm546 = vcmask 195584
    %v548 = vsel %vm546, %v542, 0
    %550 = vmatprep.subr.mxu0 0.0
    %551 = vmatpush1.msra.mxu0 %v543
    %552 = vmatprep.subr.mxu0 0.0
    %553 = vmatpush1.msra.mxu0 %v544
    %554 = vmatprep.subr.mxu0 0.0
    %555 = vmatpush1.msra.mxu0 %v545
    %556 = vmatprep.subr.mxu0 0.0
    %557 = vmatpush1.msra.mxu0 0.0
    %558 = vmatprep.subr.mxu0 0.0
    %559 = vmatpush1.msra.mxu0 0.0
    %560 = vmatprep.subr.mxu0 0.0
    %561 = vmatpush1.msra.mxu0 0.0
    %562 = vmatprep.subr.mxu0 0.0
    %563 = vmatpush1.msra.mxu0 0.0
    %564 = vmatprep.subr.mxu0 0.0
    %565 = vmatpush1.msra.mxu0 0.0
    %566 = vmatprep.subr.mxu0 0.0
    %567 = vmatpush1.msra.mxu0 0.0
    %568 = vmatprep.subr.mxu0 0.0
    %569 = vmatpush1.msra.mxu0 0.0
    %570 = vmatprep.subr.mxu0 0.0
    %571 = vmatpush1.msra.mxu0 0.0
    %572 = vmatprep.subr.mxu0 0.0
    %573 = vmatpush1.msra.mxu0 0.0
    %574 = vmatprep.subr.mxu0 0.0
    %575 = vmatpush1.msra.mxu0 0.0
    %576 = vmatprep.subr.mxu0 0.0
    %577 = vmatpush1.msra.mxu0 0.0
    %578 = vmatprep.subr.mxu0 0.0
    %579 = vmatpush1.msra.mxu0 0.0
    %580 = vmatprep.subr.mxu0 0.0
    %581 = vmatpush1.msra.mxu0 0.0
    %582 = vmatprep.subr.mxu0 0.0
    %583 = vmatpush1.msra.mxu0 0.0
    %584 = vmatprep.subr.mxu0 0.0
    %585 = vmatpush1.msra.mxu0 0.0
    %586 = vmatprep.subr.mxu0 0.0
    %587 = vmatpush1.msra.mxu0 0.0
    %588 = vmatprep.subr.mxu0 0.0
    %589 = vmatpush1.msra.mxu0 0.0
    %590 = vmatprep.subr.mxu0 0.0
    %591 = vmatpush1.msra.mxu0 0.0
    %592 = vmatprep.subr.mxu0 0.0
    %593 = vmatpush1.msra.mxu0 0.0
    %594 = vmatprep.subr.mxu0 0.0
    %595 = vmatpush1.msra.mxu0 0.0
    %596 = vmatprep.subr.mxu0 0.0
    %597 = vmatpush1.msra.mxu0 0.0
    %598 = vmatprep.subr.mxu0 0.0
    %599 = vmatpush1.msra.mxu0 0.0
    %600 = vmatprep.subr.mxu0 0.0
    %601 = vmatpush1.msra.mxu0 0.0
    %602 = vmatprep.subr.mxu0 0.0
    %603 = vmatpush1.msra.mxu0 0.0
    %604 = vmatprep.subr.mxu0 0.0
    %605 = vmatpush1.msra.mxu0 0.0
    %606 = vmatprep.subr.mxu0 0.0
    %607 = vmatpush1.msra.mxu0 0.0
    %608 = vmatprep.subr.mxu0 0.0
    %609 = vmatpush1.msra.mxu0 0.0
    %610 = vmatprep.subr.mxu0 0.0
    %611 = vmatpush1.msra.mxu0 0.0
    %612 = vmatprep.subr.mxu0 0.0
    %613 = vmatpush1.msra.mxu0 0.0
    %614 = vmatprep.mubr.f32.mxu0 0.0
    %615 = vmatmul.mubr.f32.gmra.mrb[0].mxu0 %v548
    %v616 = vpop.f32.mrb[0].mxu0
    %v617 = vadd.f32 0.0, %v616
    %v618 = vpop.f32.mrb[0].mxu0
    %619 = vdwg.mxu0
    %v620 = vadd.f32 %v541, %v617
    %621 = vset.pattern.permute.xlu0 24
    %622 = vperm.xlu0 %621, %v542
    %v623 = vpop.permute.xlu0 %622
    %625 = vset.pattern.permute.xlu0 25
    %626 = vperm.xlu0 %625, %v542
    %v627 = vpop.permute.xlu0 %626
    %629 = vset.pattern.permute.xlu0 26
    %630 = vperm.xlu0 %629, %v542
    %v631 = vpop.permute.xlu0 %630
    %633 = vset.pattern.permute.xlu0 27
    %634 = vperm.xlu0 %633, %v542
    %v635 = vpop.permute.xlu0 %634
    %637 = vset.pattern.permute.xlu0 28
    %638 = vperm.xlu0 %637, %v542
    %v639 = vpop.permute.xlu0 %638
    %641 = vset.pattern.permute.xlu0 29
    %642 = vperm.xlu0 %641, %v542
    %v643 = vpop.permute.xlu0 %642
    %645 = vset.pattern.permute.xlu0 30
    %646 = vperm.xlu0 %645, %v542
    %v647 = vpop.permute.xlu0 %646
    %v649 = vmax.f32 %v620, 0.0
    %v650 = vlaneseq
    %v651 = vshrl.u32 %v650, 7
    %v652 = vsub.s32 0, %v651
    %v653 = vrot.slane %v649, %v652
    %v654 = vmul.f32 %v623, %v653
    %v655 = vadd.f32 %v620, %v654
    %v656 = vmax.f32 %v655, 0.0
    %v657 = vlaneseq
    %v658 = vshrl.u32 %v657, 7
    %v659 = vsub.s32 1, %v658
    %v660 = vrot.slane %v656, %v659
    %v661 = vmul.f32 %v627, %v660
    %v662 = vadd.f32 %v655, %v661
    %v663 = vmax.f32 %v662, 0.0
    %v664 = vlaneseq
    %v665 = vshrl.u32 %v664, 7
    %v666 = vsub.s32 2, %v665
    %v667 = vrot.slane %v663, %v666
    %v668 = vmul.f32 %v631, %v667
    %v669 = vadd.f32 %v662, %v668
    %v670 = vmax.f32 %v669, 0.0
    %v671 = vlaneseq
    %v672 = vshrl.u32 %v671, 7
    %v673 = vsub.s32 3, %v672
    %v674 = vrot.slane %v670, %v673
    %v675 = vmul.f32 %v635, %v674
    %v676 = vadd.f32 %v669, %v675
    %v677 = vmax.f32 %v676, 0.0
    %v678 = vlaneseq
    %v679 = vshrl.u32 %v678, 7
    %v680 = vsub.s32 4, %v679
    %v681 = vrot.slane %v677, %v680
    %v682 = vmul.f32 %v639, %v681
    %v683 = vadd.f32 %v676, %v682
    %v684 = vmax.f32 %v683, 0.0
    %v685 = vlaneseq
    %v686 = vshrl.u32 %v685, 7
    %v687 = vsub.s32 5, %v686
    %v688 = vrot.slane %v684, %v687
    %v689 = vmul.f32 %v643, %v688
    %v690 = vadd.f32 %v683, %v689
    %v691 = vmax.f32 %v690, 0.0
    %v692 = vlaneseq
    %v693 = vshrl.u32 %v692, 7
    %v694 = vsub.s32 6, %v693
    %v695 = vrot.slane %v691, %v694
    %v696 = vmul.f32 %v647, %v695
    %v697 = vadd.f32 %v690, %v696
    %v698 = vmax.f32 %v697, 0.0
    %699 = vst [vmem:[#allocation3 + $0x18] sm:$0xff] %v698
    %v700 = vld [vmem:[%s4] sm:$0xff]
    %v701 = vld [vmem:[#allocation3] sm:$0xff]
    %v702 = vld [vmem:[#allocation3 + $0x8] sm:$0xff]
    %v703 = vld [vmem:[#allocation3 + $0x10] sm:$0xff]
    %v704 = vld [vmem:[#allocation3 + $0x18] sm:$0xff]
    %v705 = vld [vmem:[#allocation3 + $0x20] sm:$0xff]
    %v706 = vld [vmem:[#allocation3 + $0x28] sm:$0xff]
    %vm707 = vcmask 392192
    %v709 = vsel %vm707, %v700, 0
    %711 = vmatprep.subr.mxu0 0.0
    %712 = vmatpush1.msra.mxu0 %v701
    %713 = vmatprep.subr.mxu0 0.0
    %714 = vmatpush1.msra.mxu0 %v702
    %715 = vmatprep.subr.mxu0 0.0
    %716 = vmatpush1.msra.mxu0 %v703
    %717 = vmatprep.subr.mxu0 0.0
    %718 = vmatpush1.msra.mxu0 %v704
    %719 = vmatprep.subr.mxu0 0.0
    %720 = vmatpush1.msra.mxu0 %v705
    %721 = vmatprep.subr.mxu0 0.0
    %722 = vmatpush1.msra.mxu0 %v706
    %723 = vmatprep.subr.mxu0 0.0
    %724 = vmatpush1.msra.mxu0 0.0
    %725 = vmatprep.subr.mxu0 0.0
    %726 = vmatpush1.msra.mxu0 0.0
    %727 = vmatprep.subr.mxu0 0.0
    %728 = vmatpush1.msra.mxu0 0.0
    %729 = vmatprep.subr.mxu0 0.0
    %730 = vmatpush1.msra.mxu0 0.0
    %731 = vmatprep.subr.mxu0 0.0
    %732 = vmatpush1.msra.mxu0 0.0
    %733 = vmatprep.subr.mxu0 0.0
    %734 = vmatpush1.msra.mxu0 0.0
    %735 = vmatprep.subr.mxu0 0.0
    %736 = vmatpush1.msra.mxu0 0.0
    %737 = vmatprep.subr.mxu0 0.0
    %738 = vmatpush1.msra.mxu0 0.0
    %739 = vmatprep.subr.mxu0 0.0
    %740 = vmatpush1.msra.mxu0 0.0
    %741 = vmatprep.subr.mxu0 0.0
    %742 = vmatpush1.msra.mxu0 0.0
    %743 = vmatprep.subr.mxu0 0.0
    %744 = vmatpush1.msra.mxu0 0.0
    %745 = vmatprep.subr.mxu0 0.0
    %746 = vmatpush1.msra.mxu0 0.0
    %747 = vmatprep.subr.mxu0 0.0
    %748 = vmatpush1.msra.mxu0 0.0
    %749 = vmatprep.subr.mxu0 0.0
    %750 = vmatpush1.msra.mxu0 0.0
    %751 = vmatprep.subr.mxu0 0.0
    %752 = vmatpush1.msra.mxu0 0.0
    %753 = vmatprep.subr.mxu0 0.0
    %754 = vmatpush1.msra.mxu0 0.0
    %755 = vmatprep.subr.mxu0 0.0
    %756 = vmatpush1.msra.mxu0 0.0
    %757 = vmatprep.subr.mxu0 0.0
    %758 = vmatpush1.msra.mxu0 0.0
    %759 = vmatprep.subr.mxu0 0.0
    %760 = vmatpush1.msra.mxu0 0.0
    %761 = vmatprep.subr.mxu0 0.0
    %762 = vmatpush1.msra.mxu0 0.0
    %763 = vmatprep.subr.mxu0 0.0
    %764 = vmatpush1.msra.mxu0 0.0
    %765 = vmatprep.subr.mxu0 0.0
    %766 = vmatpush1.msra.mxu0 0.0
    %767 = vmatprep.subr.mxu0 0.0
    %768 = vmatpush1.msra.mxu0 0.0
    %769 = vmatprep.subr.mxu0 0.0
    %770 = vmatpush1.msra.mxu0 0.0
    %771 = vmatprep.subr.mxu0 0.0
    %772 = vmatpush1.msra.mxu0 0.0
    %773 = vmatprep.subr.mxu0 0.0
    %774 = vmatpush1.msra.mxu0 0.0
    %775 = vmatprep.mubr.f32.mxu0 0.0
    %776 = vmatmul.mubr.f32.gmra.mrb[0].mxu0 %v709
    %v777 = vpop.f32.mrb[0].mxu0
    %v778 = vadd.f32 0.0, %v777
    %v779 = vpop.f32.mrb[0].mxu0
    %780 = vdwg.mxu0
    %781 = vst [vmem:[#allocation7] sm:$0xff] %v778
    // Predicated region
    $region26: #{tpu_custom_call.1} parent=1 // pred_check
      _
    $region27: #{tpu_custom_call.1} parent=1 // pred_check_branch
      %783 = sbr.rel (0) target = $region29
    $region28: #{tpu_custom_call.1} parent=1 // pred_region
      %s785 = ssub.s32 128, 128
      %786 = vsyncadd [#allocation6], %s785
      %s788 = sshll.u32 [#allocation7], 4
      %s789 = int_to_ptr.vmem [resolvable:$true] %s788
      %791 = dma.vmem_to_hbm [thread:$0]  %s789, 128, %s5, [#allocation6]
    $region29: #{tpu_custom_call.1} parent=1 // pred_fallthru
      _
    // Predicated region
    $region30: #{tpu_custom_call.1} parent=1 // pred_check
      _
    $region31: #{tpu_custom_call.1} parent=1 // pred_check_branch
      %793 = sbr.rel (0) target = $region33
    $region32: #{tpu_custom_call.1} parent=1 // pred_region
      %794 = dma.done [#allocation6], 128
    $region33: #{tpu_custom_call.1} parent=1 // pred_fallthru
      _
    %795 = vsyncpa [#allocation5], 1
    %796 = vsyncpa [#allocation6], 1

// kernel: tpu_custom_call.1
$region0: #{tpu_custom_call.1}
  #allocation0 [shape = 'u32[]', space=smem, size = 0x4, offset = 0x4, fixed_abs, tag = 'smem constant byte address 0x4 - core index']
  #allocation1 [shape = 'u32[144,128]{1,0:T(1,128)}', space=vmem, size = 0x12000, scoped, tag = 'internal scratch']
  #allocation2 [shape = 'f32[32,128]{1,0:T(8,128)}', space=vmem, size = 0x4000, scoped, tag = 'scratch operand']
  #allocation3 [shape = 'f32[48,128]{1,0:T(8,128)}', space=vmem, size = 0x6000, scoped, tag = 'scratch operand']
  %s0 = inlined_call_operand.vmem [shape: f32[16,128], index: 0, kind: input, shape index: {}]
  %s1 = inlined_call_operand.vmem [shape: f32[32,16], index: 1, kind: input, shape index: {}]
  %s2 = inlined_call_operand.vmem [shape: f32[32,32], index: 2, kind: input, shape index: {}]
  %s3 = inlined_call_operand.hbm [shape: f32[1,32,32], index: 3, kind: input, shape index: {}]
  %s4 = inlined_call_operand.vmem [shape: f32[8,48], index: 4, kind: input, shape index: {}]
  %s5 = inlined_call_operand.hbm [shape: f32[8,128], index: 5, kind: output, shape index: {}]
  %s6 = sld [smem:[#allocation0]]
  $region34: #{tpu_custom_call.1} parent=0
    _
  %s8 = ssub.s32 1, %s6
  %s9 = scalar_select 0, %s8, %s6
  $region1: #{tpu_custom_call.1} parent=0
    #allocation4 [shape = 'u8[16384]{0}', space=vmem, size = 0x4000, scoped, tag = 'input window, operand 3, single buffered']
    #allocation5 [shape = 's32[1]{0}', space=sflag, size = 0x4, scoped, tag = 'scoped memory for tpu_custom_call.1']
    #allocation6 [shape = 's32[1]{0}', space=sflag, size = 0x4, scoped, tag = 'scoped memory for tpu_custom_call.1']
    #allocation7 [shape = 'u8[4096]{0}', space=vmem, size = 0x1000, scoped, tag = 'output window, operand 0, single buffered']
    %10 = vsyncpa [#allocation5], 0
    %11 = vsyncpa [#allocation6], 0
    // Predicated region
    $region2: #{tpu_custom_call.1} parent=1 // pred_check
      _
    $region3: #{tpu_custom_call.1} parent=1 // pred_check_branch
      %13 = sbr.rel (0) target = $region5
    $region4: #{tpu_custom_call.1} parent=1 // pred_region
      _
    $region5: #{tpu_custom_call.1} parent=1 // pred_fallthru
      _
    // Predicated region
    $region6: #{tpu_custom_call.1} parent=1 // pred_check
      _
    $region7: #{tpu_custom_call.1} parent=1 // pred_check_branch
      %15 = sbr.rel (0) target = $region9
    $region8: #{tpu_custom_call.1} parent=1 // pred_region
      _
    $region9: #{tpu_custom_call.1} parent=1 // pred_fallthru
      _
    // Predicated region
    $region10: #{tpu_custom_call.1} parent=1 // pred_check
      _
    $region11: #{tpu_custom_call.1} parent=1 // pred_check_branch
      %17 = sbr.rel (0) target = $region13
    $region12: #{tpu_custom_call.1} parent=1 // pred_region
      _
    $region13: #{tpu_custom_call.1} parent=1 // pred_fallthru
      _
    // Predicated region
    $region14: #{tpu_custom_call.1} parent=1 // pred_check
      _
    $region15: #{tpu_custom_call.1} parent=1 // pred_check_branch
      %19 = sbr.rel (0) target = $region17
    $region16: #{tpu_custom_call.1} parent=1 // pred_region
      %s21 = ssub.s32 512, 512
      %22 = vsyncadd [#allocation5], %s21
      %s23 = sshll.u32 [#allocation4], 4
      %s24 = int_to_ptr.vmem [resolvable:$true] %s23
      %29 = dma.hbm_to_vmem [thread:$0]  %s3, 512, %s24, [#allocation5], 128, 128, 8
    $region17: #{tpu_custom_call.1} parent=1 // pred_fallthru
      _
    // Predicated region
    $region18: #{tpu_custom_call.1} parent=1 // pred_check
      _
    $region19: #{tpu_custom_call.1} parent=1 // pred_check_branch
      %31 = sbr.rel (0) target = $region21
    $region20: #{tpu_custom_call.1} parent=1 // pred_region
      _
    $region21: #{tpu_custom_call.1} parent=1 // pred_fallthru
      _
    // Predicated region
    $region22: #{tpu_custom_call.1} parent=1 // pred_check
      _
    $region23: #{tpu_custom_call.1} parent=1 // pred_check_branch
      %33 = sbr.rel (0) target = $region25
    $region24: #{tpu_custom_call.1} parent=1 // pred_region
      %34 = dma.done [#allocation5], 512
    $region25: #{tpu_custom_call.1} parent=1 // pred_fallthru
      _
    %v35 = vld [vmem:[%s0] sm:$0xff]
    %v36 = vld [vmem:[%s0 + $0x8] sm:$0xff]
    %37 = vst [vmem:[#allocation3 + $0x20] sm:$0xff] %v35
    %38 = vst [vmem:[#allocation3 + $0x28] sm:$0xff] %v36
    %v39 = vld [vmem:[%s1] sm:$0xff]
    %v40 = vld [vmem:[%s1 + $0x8] sm:$0xff]
    %v41 = vld [vmem:[%s1 + $0x10] sm:$0xff]
    %v42 = vld [vmem:[%s1 + $0x18] sm:$0xff]
    %vm43 = vcmask 130048
    %v45 = vsel %vm43, %v39, 0
    %v48 = vsel %vm43, %v40, 0
    %v51 = vsel %vm43, %v41, 0
    %v54 = vsel %vm43, %v42, 0
    %56 = vmatprep.subr.mxu0 0.0
    %57 = vmatpush1.msra.mxu0 %v35
    %58 = vmatprep.subr.mxu0 0.0
    %59 = vmatpush1.msra.mxu0 %v36
    %60 = vmatprep.subr.mxu0 0.0
    %61 = vmatpush1.msra.mxu0 0.0
    %62 = vmatprep.subr.mxu0 0.0
    %63 = vmatpush1.msra.mxu0 0.0
    %64 = vmatprep.subr.mxu0 0.0
    %65 = vmatpush1.msra.mxu0 0.0
    %66 = vmatprep.subr.mxu0 0.0
    %67 = vmatpush1.msra.mxu0 0.0
    %68 = vmatprep.subr.mxu0 0.0
    %69 = vmatpush1.msra.mxu0 0.0
    %70 = vmatprep.subr.mxu0 0.0
    %71 = vmatpush1.msra.mxu0 0.0
    %72 = vmatprep.subr.mxu0 0.0
    %73 = vmatpush1.msra.mxu0 0.0
    %74 = vmatprep.subr.mxu0 0.0
    %75 = vmatpush1.msra.mxu0 0.0
    %76 = vmatprep.subr.mxu0 0.0
    %77 = vmatpush1.msra.mxu0 0.0
    %78 = vmatprep.subr.mxu0 0.0
    %79 = vmatpush1.msra.mxu0 0.0
    %80 = vmatprep.subr.mxu0 0.0
    %81 = vmatpush1.msra.mxu0 0.0
    %82 = vmatprep.subr.mxu0 0.0
    %83 = vmatpush1.msra.mxu0 0.0
    %84 = vmatprep.subr.mxu0 0.0
    %85 = vmatpush1.msra.mxu0 0.0
    %86 = vmatprep.subr.mxu0 0.0
    %87 = vmatpush1.msra.mxu0 0.0
    %88 = vmatprep.subr.mxu0 0.0
    %89 = vmatpush1.msra.mxu0 0.0
    %90 = vmatprep.subr.mxu0 0.0
    %91 = vmatpush1.msra.mxu0 0.0
    %92 = vmatprep.subr.mxu0 0.0
    %93 = vmatpush1.msra.mxu0 0.0
    %94 = vmatprep.subr.mxu0 0.0
    %95 = vmatpush1.msra.mxu0 0.0
    %96 = vmatprep.subr.mxu0 0.0
    %97 = vmatpush1.msra.mxu0 0.0
    %98 = vmatprep.subr.mxu0 0.0
    %99 = vmatpush1.msra.mxu0 0.0
    %100 = vmatprep.subr.mxu0 0.0
    %101 = vmatpush1.msra.mxu0 0.0
    %102 = vmatprep.subr.mxu0 0.0
    %103 = vmatpush1.msra.mxu0 0.0
    %104 = vmatprep.subr.mxu0 0.0
    %105 = vmatpush1.msra.mxu0 0.0
    %106 = vmatprep.subr.mxu0 0.0
    %107 = vmatpush1.msra.mxu0 0.0
    %108 = vmatprep.subr.mxu0 0.0
    %109 = vmatpush1.msra.mxu0 0.0
    %110 = vmatprep.subr.mxu0 0.0
    %111 = vmatpush1.msra.mxu0 0.0
    %112 = vmatprep.subr.mxu0 0.0
    %113 = vmatpush1.msra.mxu0 0.0
    %114 = vmatprep.subr.mxu0 0.0
    %115 = vmatpush1.msra.mxu0 0.0
    %116 = vmatprep.subr.mxu0 0.0
    %117 = vmatpush1.msra.mxu0 0.0
    %118 = vmatprep.subr.mxu0 0.0
    %119 = vmatpush1.msra.mxu0 0.0
    %120 = vmatprep.mubr.f32.mxu0 0.0
    %121 = vmatmul.mubr.f32.gmra.mrb[0].mxu0 %v45
    %v122 = vpop.f32.mrb[0].mxu0
    %v123 = vadd.f32 0.0, %v122
    %v124 = vpop.f32.mrb[0].mxu0
    %125 = vmatprep.mubr.f32.mxu0 0.0
    %126 = vmatmul.mubr.f32.gmra.mrb[0].mxu0 %v48
    %v127 = vpop.f32.mrb[0].mxu0
    %v128 = vadd.f32 0.0, %v127
    %v129 = vpop.f32.mrb[0].mxu0
    %130 = vmatprep.mubr.f32.mxu0 0.0
    %131 = vmatmul.mubr.f32.gmra.mrb[0].mxu0 %v51
    %v132 = vpop.f32.mrb[0].mxu0
    %v133 = vadd.f32 0.0, %v132
    %v134 = vpop.f32.mrb[0].mxu0
    %135 = vmatprep.mubr.f32.mxu0 0.0
    %136 = vmatmul.mubr.f32.gmra.mrb[0].mxu0 %v54
    %v137 = vpop.f32.mrb[0].mxu0
    %v138 = vadd.f32 0.0, %v137
    %v139 = vpop.f32.mrb[0].mxu0
    %140 = vdwg.mxu0
    %141 = vst [vmem:[#allocation2] sm:$0xff] %v123
    %142 = vst [vmem:[#allocation2 + $0x8] sm:$0xff] %v128
    %143 = vst [vmem:[#allocation2 + $0x10] sm:$0xff] %v133
    %144 = vst [vmem:[#allocation2 + $0x18] sm:$0xff] %v138
    %v145 = vld [vmem:[#allocation2] sm:$0xff]
    %v146 = vld [vmem:[#allocation4] sm:$0xff]
    %148 = vset.pattern.permute.xlu0 0
    %149 = vperm.xlu0 %148, %v146
    %v150 = vpop.permute.xlu0 %149
    %152 = vset.pattern.permute.xlu0 1
    %153 = vperm.xlu0 %152, %v146
    %v154 = vpop.permute.xlu0 %153
    %156 = vset.pattern.permute.xlu0 2
    %157 = vperm.xlu0 %156, %v146
    %v158 = vpop.permute.xlu0 %157
    %160 = vset.pattern.permute.xlu0 3
    %161 = vperm.xlu0 %160, %v146
    %v162 = vpop.permute.xlu0 %161
    %164 = vset.pattern.permute.xlu0 4
    %165 = vperm.xlu0 %164, %v146
    %v166 = vpop.permute.xlu0 %165
    %168 = vset.pattern.permute.xlu0 5
    %169 = vperm.xlu0 %168, %v146
    %v170 = vpop.permute.xlu0 %169
    %172 = vset.pattern.permute.xlu0 6
    %173 = vperm.xlu0 %172, %v146
    %v174 = vpop.permute.xlu0 %173
    %v176 = vmax.f32 %v145, 0.0
    %v177 = vlaneseq
    %v178 = vshrl.u32 %v177, 7
    %v179 = vsub.s32 0, %v178
    %v180 = vrot.slane %v176, %v179
    %v181 = vmul.f32 %v150, %v180
    %v182 = vadd.f32 %v145, %v181
    %v183 = vmax.f32 %v182, 0.0
    %v184 = vlaneseq
    %v185 = vshrl.u32 %v184, 7
    %v186 = vsub.s32 1, %v185
    %v187 = vrot.slane %v183, %v186
    %v188 = vmul.f32 %v154, %v187
    %v189 = vadd.f32 %v182, %v188
    %v190 = vmax.f32 %v189, 0.0
    %v191 = vlaneseq
    %v192 = vshrl.u32 %v191, 7
    %v193 = vsub.s32 2, %v192
    %v194 = vrot.slane %v190, %v193
    %v195 = vmul.f32 %v158, %v194
    %v196 = vadd.f32 %v189, %v195
    %v197 = vmax.f32 %v196, 0.0
    %v198 = vlaneseq
    %v199 = vshrl.u32 %v198, 7
    %v200 = vsub.s32 3, %v199
    %v201 = vrot.slane %v197, %v200
    %v202 = vmul.f32 %v162, %v201
    %v203 = vadd.f32 %v196, %v202
    %v204 = vmax.f32 %v203, 0.0
    %v205 = vlaneseq
    %v206 = vshrl.u32 %v205, 7
    %v207 = vsub.s32 4, %v206
    %v208 = vrot.slane %v204, %v207
    %v209 = vmul.f32 %v166, %v208
    %v210 = vadd.f32 %v203, %v209
    %v211 = vmax.f32 %v210, 0.0
    %v212 = vlaneseq
    %v213 = vshrl.u32 %v212, 7
    %v214 = vsub.s32 5, %v213
    %v215 = vrot.slane %v211, %v214
    %v216 = vmul.f32 %v170, %v215
    %v217 = vadd.f32 %v210, %v216
    %v218 = vmax.f32 %v217, 0.0
    %v219 = vlaneseq
    %v220 = vshrl.u32 %v219, 7
    %v221 = vsub.s32 6, %v220
    %v222 = vrot.slane %v218, %v221
    %v223 = vmul.f32 %v174, %v222
    %v224 = vadd.f32 %v217, %v223
    %v225 = vmax.f32 %v224, 0.0
    %226 = vst [vmem:[#allocation3] sm:$0xff] %v225
    %v227 = vld [vmem:[#allocation2 + $0x8] sm:$0xff]
    %v228 = vld [vmem:[#allocation4 + $0x8] sm:$0xff]
    %v229 = vld [vmem:[#allocation3] sm:$0xff]
    %vm230 = vcmask 64512
    %v232 = vsel %vm230, %v228, 0
    %234 = vmatprep.subr.mxu0 0.0
    %235 = vmatpush1.msra.mxu0 %v229
    %236 = vmatprep.subr.mxu0 0.0
    %237 = vmatpush1.msra.mxu0 0.0
    %238 = vmatprep.subr.mxu0 0.0
    %239 = vmatpush1.msra.mxu0 0.0
    %240 = vmatprep.subr.mxu0 0.0
    %241 = vmatpush1.msra.mxu0 0.0
    %242 = vmatprep.subr.mxu0 0.0
    %243 = vmatpush1.msra.mxu0 0.0
    %244 = vmatprep.subr.mxu0 0.0
    %245 = vmatpush1.msra.mxu0 0.0
    %246 = vmatprep.subr.mxu0 0.0
    %247 = vmatpush1.msra.mxu0 0.0
    %248 = vmatprep.subr.mxu0 0.0
    %249 = vmatpush1.msra.mxu0 0.0
    %250 = vmatprep.subr.mxu0 0.0
    %251 = vmatpush1.msra.mxu0 0.0
    %252 = vmatprep.subr.mxu0 0.0
    %253 = vmatpush1.msra.mxu0 0.0
    %254 = vmatprep.subr.mxu0 0.0
    %255 = vmatpush1.msra.mxu0 0.0
    %256 = vmatprep.subr.mxu0 0.0
    %257 = vmatpush1.msra.mxu0 0.0
    %258 = vmatprep.subr.mxu0 0.0
    %259 = vmatpush1.msra.mxu0 0.0
    %260 = vmatprep.subr.mxu0 0.0
    %261 = vmatpush1.msra.mxu0 0.0
    %262 = vmatprep.subr.mxu0 0.0
    %263 = vmatpush1.msra.mxu0 0.0
    %264 = vmatprep.subr.mxu0 0.0
    %265 = vmatpush1.msra.mxu0 0.0
    %266 = vmatprep.subr.mxu0 0.0
    %267 = vmatpush1.msra.mxu0 0.0
    %268 = vmatprep.subr.mxu0 0.0
    %269 = vmatpush1.msra.mxu0 0.0
    %270 = vmatprep.subr.mxu0 0.0
    %271 = vmatpush1.msra.mxu0 0.0
    %272 = vmatprep.subr.mxu0 0.0
    %273 = vmatpush1.msra.mxu0 0.0
    %274 = vmatprep.subr.mxu0 0.0
    %275 = vmatpush1.msra.mxu0 0.0
    %276 = vmatprep.subr.mxu0 0.0
    %277 = vmatpush1.msra.mxu0 0.0
    %278 = vmatprep.subr.mxu0 0.0
    %279 = vmatpush1.msra.mxu0 0.0
    %280 = vmatprep.subr.mxu0 0.0
    %281 = vmatpush1.msra.mxu0 0.0
    %282 = vmatprep.subr.mxu0 0.0
    %283 = vmatpush1.msra.mxu0 0.0
    %284 = vmatprep.subr.mxu0 0.0
    %285 = vmatpush1.msra.mxu0 0.0
    %286 = vmatprep.subr.mxu0 0.0
    %287 = vmatpush1.msra.mxu0 0.0
    %288 = vmatprep.subr.mxu0 0.0
    %289 = vmatpush1.msra.mxu0 0.0
    %290 = vmatprep.subr.mxu0 0.0
    %291 = vmatpush1.msra.mxu0 0.0
    %292 = vmatprep.subr.mxu0 0.0
    %293 = vmatpush1.msra.mxu0 0.0
    %294 = vmatprep.subr.mxu0 0.0
    %295 = vmatpush1.msra.mxu0 0.0
    %296 = vmatprep.subr.mxu0 0.0
    %297 = vmatpush1.msra.mxu0 0.0
    %298 = vmatprep.mubr.f32.mxu0 0.0
    %299 = vmatmul.mubr.f32.gmra.mrb[0].mxu0 %v232
    %v300 = vpop.f32.mrb[0].mxu0
    %v301 = vadd.f32 0.0, %v300
    %v302 = vpop.f32.mrb[0].mxu0
    %303 = vdwg.mxu0
    %v304 = vadd.f32 %v227, %v301
    %305 = vset.pattern.permute.xlu0 8
    %306 = vperm.xlu0 %305, %v228
    %v307 = vpop.permute.xlu0 %306
    %309 = vset.pattern.permute.xlu0 9
    %310 = vperm.xlu0 %309, %v228
    %v311 = vpop.permute.xlu0 %310
    %313 = vset.pattern.permute.xlu0 10
    %314 = vperm.xlu0 %313, %v228
    %v315 = vpop.permute.xlu0 %314
    %317 = vset.pattern.permute.xlu0 11
    %318 = vperm.xlu0 %317, %v228
    %v319 = vpop.permute.xlu0 %318
    %321 = vset.pattern.permute.xlu0 12
    %322 = vperm.xlu0 %321, %v228
    %v323 = vpop.permute.xlu0 %322
    %325 = vset.pattern.permute.xlu0 13
    %326 = vperm.xlu0 %325, %v228
    %v327 = vpop.permute.xlu0 %326
    %329 = vset.pattern.permute.xlu0 14
    %330 = vperm.xlu0 %329, %v228
    %v331 = vpop.permute.xlu0 %330
    %v333 = vmax.f32 %v304, 0.0
    %v334 = vlaneseq
    %v335 = vshrl.u32 %v334, 7
    %v336 = vsub.s32 0, %v335
    %v337 = vrot.slane %v333, %v336
    %v338 = vmul.f32 %v307, %v337
    %v339 = vadd.f32 %v304, %v338
    %v340 = vmax.f32 %v339, 0.0
    %v341 = vlaneseq
    %v342 = vshrl.u32 %v341, 7
    %v343 = vsub.s32 1, %v342
    %v344 = vrot.slane %v340, %v343
    %v345 = vmul.f32 %v311, %v344
    %v346 = vadd.f32 %v339, %v345
    %v347 = vmax.f32 %v346, 0.0
    %v348 = vlaneseq
    %v349 = vshrl.u32 %v348, 7
    %v350 = vsub.s32 2, %v349
    %v351 = vrot.slane %v347, %v350
    %v352 = vmul.f32 %v315, %v351
    %v353 = vadd.f32 %v346, %v352
    %v354 = vmax.f32 %v353, 0.0
    %v355 = vlaneseq
    %v356 = vshrl.u32 %v355, 7
    %v357 = vsub.s32 3, %v356
    %v358 = vrot.slane %v354, %v357
    %v359 = vmul.f32 %v319, %v358
    %v360 = vadd.f32 %v353, %v359
    %v361 = vmax.f32 %v360, 0.0
    %v362 = vlaneseq
    %v363 = vshrl.u32 %v362, 7
    %v364 = vsub.s32 4, %v363
    %v365 = vrot.slane %v361, %v364
    %v366 = vmul.f32 %v323, %v365
    %v367 = vadd.f32 %v360, %v366
    %v368 = vmax.f32 %v367, 0.0
    %v369 = vlaneseq
    %v370 = vshrl.u32 %v369, 7
    %v371 = vsub.s32 5, %v370
    %v372 = vrot.slane %v368, %v371
    %v373 = vmul.f32 %v327, %v372
    %v374 = vadd.f32 %v367, %v373
    %v375 = vmax.f32 %v374, 0.0
    %v376 = vlaneseq
    %v377 = vshrl.u32 %v376, 7
    %v378 = vsub.s32 6, %v377
    %v379 = vrot.slane %v375, %v378
    %v380 = vmul.f32 %v331, %v379
    %v381 = vadd.f32 %v374, %v380
    %v382 = vmax.f32 %v381, 0.0
    %383 = vst [vmem:[#allocation3 + $0x8] sm:$0xff] %v382
    %v384 = vld [vmem:[#allocation2 + $0x10] sm:$0xff]
    %v385 = vld [vmem:[#allocation4 + $0x10] sm:$0xff]
    %v386 = vld [vmem:[#allocation3] sm:$0xff]
    %v387 = vld [vmem:[#allocation3 + $0x8] sm:$0xff]
    %v389 = vsel %vm43, %v385, 0
    %391 = vmatprep.subr.mxu0 0.0
    %392 = vmatpush1.msra.mxu0 %v386
    %393 = vmatprep.subr.mxu0 0.0
    %394 = vmatpush1.msra.mxu0 %v387
    %395 = vmatprep.subr.mxu0 0.0
    %396 = vmatpush1.msra.mxu0 0.0
    %397 = vmatprep.subr.mxu0 0.0
    %398 = vmatpush1.msra.mxu0 0.0
    %399 = vmatprep.subr.mxu0 0.0
    %400 = vmatpush1.msra.mxu0 0.0
    %401 = vmatprep.subr.mxu0 0.0
    %402 = vmatpush1.msra.mxu0 0.0
    %403 = vmatprep.subr.mxu0 0.0
    %404 = vmatpush1.msra.mxu0 0.0
    %405 = vmatprep.subr.mxu0 0.0
    %406 = vmatpush1.msra.mxu0 0.0
    %407 = vmatprep.subr.mxu0 0.0
    %408 = vmatpush1.msra.mxu0 0.0
    %409 = vmatprep.subr.mxu0 0.0
    %410 = vmatpush1.msra.mxu0 0.0
    %411 = vmatprep.subr.mxu0 0.0
    %412 = vmatpush1.msra.mxu0 0.0
    %413 = vmatprep.subr.mxu0 0.0
    %414 = vmatpush1.msra.mxu0 0.0
    %415 = vmatprep.subr.mxu0 0.0
    %416 = vmatpush1.msra.mxu0 0.0
    %417 = vmatprep.subr.mxu0 0.0
    %418 = vmatpush1.msra.mxu0 0.0
    %419 = vmatprep.subr.mxu0 0.0
    %420 = vmatpush1.msra.mxu0 0.0
    %421 = vmatprep.subr.mxu0 0.0
    %422 = vmatpush1.msra.mxu0 0.0
    %423 = vmatprep.subr.mxu0 0.0
    %424 = vmatpush1.msra.mxu0 0.0
    %425 = vmatprep.subr.mxu0 0.0
    %426 = vmatpush1.msra.mxu0 0.0
    %427 = vmatprep.subr.mxu0 0.0
    %428 = vmatpush1.msra.mxu0 0.0
    %429 = vmatprep.subr.mxu0 0.0
    %430 = vmatpush1.msra.mxu0 0.0
    %431 = vmatprep.subr.mxu0 0.0
    %432 = vmatpush1.msra.mxu0 0.0
    %433 = vmatprep.subr.mxu0 0.0
    %434 = vmatpush1.msra.mxu0 0.0
    %435 = vmatprep.subr.mxu0 0.0
    %436 = vmatpush1.msra.mxu0 0.0
    %437 = vmatprep.subr.mxu0 0.0
    %438 = vmatpush1.msra.mxu0 0.0
    %439 = vmatprep.subr.mxu0 0.0
    %440 = vmatpush1.msra.mxu0 0.0
    %441 = vmatprep.subr.mxu0 0.0
    %442 = vmatpush1.msra.mxu0 0.0
    %443 = vmatprep.subr.mxu0 0.0
    %444 = vmatpush1.msra.mxu0 0.0
    %445 = vmatprep.subr.mxu0 0.0
    %446 = vmatpush1.msra.mxu0 0.0
    %447 = vmatprep.subr.mxu0 0.0
    %448 = vmatpush1.msra.mxu0 0.0
    %449 = vmatprep.subr.mxu0 0.0
    %450 = vmatpush1.msra.mxu0 0.0
    %451 = vmatprep.subr.mxu0 0.0
    %452 = vmatpush1.msra.mxu0 0.0
    %453 = vmatprep.subr.mxu0 0.0
    %454 = vmatpush1.msra.mxu0 0.0
    %455 = vmatprep.mubr.f32.mxu0 0.0
    %456 = vmatmul.mubr.f32.gmra.mrb[0].mxu0 %v389
    %v457 = vpop.f32.mrb[0].mxu0
    %v458 = vadd.f32 0.0, %v457
    %v459 = vpop.f32.mrb[0].mxu0
    %460 = vdwg.mxu0
    %v461 = vadd.f32 %v384, %v458
    %462 = vset.pattern.permute.xlu0 16
    %463 = vperm.xlu0 %462, %v385
    %v464 = vpop.permute.xlu0 %463
    %466 = vset.pattern.permute.xlu0 17
    %467 = vperm.xlu0 %466, %v385
    %v468 = vpop.permute.xlu0 %467
    %470 = vset.pattern.permute.xlu0 18
    %471 = vperm.xlu0 %470, %v385
    %v472 = vpop.permute.xlu0 %471
    %474 = vset.pattern.permute.xlu0 19
    %475 = vperm.xlu0 %474, %v385
    %v476 = vpop.permute.xlu0 %475
    %478 = vset.pattern.permute.xlu0 20
    %479 = vperm.xlu0 %478, %v385
    %v480 = vpop.permute.xlu0 %479
    %482 = vset.pattern.permute.xlu0 21
    %483 = vperm.xlu0 %482, %v385
    %v484 = vpop.permute.xlu0 %483
    %486 = vset.pattern.permute.xlu0 22
    %487 = vperm.xlu0 %486, %v385
    %v488 = vpop.permute.xlu0 %487
    %v490 = vmax.f32 %v461, 0.0
    %v491 = vlaneseq
    %v492 = vshrl.u32 %v491, 7
    %v493 = vsub.s32 0, %v492
    %v494 = vrot.slane %v490, %v493
    %v495 = vmul.f32 %v464, %v494
    %v496 = vadd.f32 %v461, %v495
    %v497 = vmax.f32 %v496, 0.0
    %v498 = vlaneseq
    %v499 = vshrl.u32 %v498, 7
    %v500 = vsub.s32 1, %v499
    %v501 = vrot.slane %v497, %v500
    %v502 = vmul.f32 %v468, %v501
    %v503 = vadd.f32 %v496, %v502
    %v504 = vmax.f32 %v503, 0.0
    %v505 = vlaneseq
    %v506 = vshrl.u32 %v505, 7
    %v507 = vsub.s32 2, %v506
    %v508 = vrot.slane %v504, %v507
    %v509 = vmul.f32 %v472, %v508
    %v510 = vadd.f32 %v503, %v509
    %v511 = vmax.f32 %v510, 0.0
    %v512 = vlaneseq
    %v513 = vshrl.u32 %v512, 7
    %v514 = vsub.s32 3, %v513
    %v515 = vrot.slane %v511, %v514
    %v516 = vmul.f32 %v476, %v515
    %v517 = vadd.f32 %v510, %v516
    %v518 = vmax.f32 %v517, 0.0
    %v519 = vlaneseq
    %v520 = vshrl.u32 %v519, 7
    %v521 = vsub.s32 4, %v520
    %v522 = vrot.slane %v518, %v521
    %v523 = vmul.f32 %v480, %v522
    %v524 = vadd.f32 %v517, %v523
    %v525 = vmax.f32 %v524, 0.0
    %v526 = vlaneseq
    %v527 = vshrl.u32 %v526, 7
    %v528 = vsub.s32 5, %v527
    %v529 = vrot.slane %v525, %v528
    %v530 = vmul.f32 %v484, %v529
    %v531 = vadd.f32 %v524, %v530
    %v532 = vmax.f32 %v531, 0.0
    %v533 = vlaneseq
    %v534 = vshrl.u32 %v533, 7
    %v535 = vsub.s32 6, %v534
    %v536 = vrot.slane %v532, %v535
    %v537 = vmul.f32 %v488, %v536
    %v538 = vadd.f32 %v531, %v537
    %v539 = vmax.f32 %v538, 0.0
    %540 = vst [vmem:[#allocation3 + $0x10] sm:$0xff] %v539
    %v541 = vld [vmem:[#allocation2 + $0x18] sm:$0xff]
    %v542 = vld [vmem:[#allocation4 + $0x18] sm:$0xff]
    %v543 = vld [vmem:[#allocation3] sm:$0xff]
    %v544 = vld [vmem:[#allocation3 + $0x8] sm:$0xff]
    %v545 = vld [vmem:[#allocation3 + $0x10] sm:$0xff]
    %vm546 = vcmask 195584
    %v548 = vsel %vm546, %v542, 0
    %550 = vmatprep.subr.mxu0 0.0
    %551 = vmatpush1.msra.mxu0 %v543
    %552 = vmatprep.subr.mxu0 0.0
    %553 = vmatpush1.msra.mxu0 %v544
    %554 = vmatprep.subr.mxu0 0.0
    %555 = vmatpush1.msra.mxu0 %v545
    %556 = vmatprep.subr.mxu0 0.0
    %557 = vmatpush1.msra.mxu0 0.0
    %558 = vmatprep.subr.mxu0 0.0
    %559 = vmatpush1.msra.mxu0 0.0
    %560 = vmatprep.subr.mxu0 0.0
    %561 = vmatpush1.msra.mxu0 0.0
    %562 = vmatprep.subr.mxu0 0.0
    %563 = vmatpush1.msra.mxu0 0.0
    %564 = vmatprep.subr.mxu0 0.0
    %565 = vmatpush1.msra.mxu0 0.0
    %566 = vmatprep.subr.mxu0 0.0
    %567 = vmatpush1.msra.mxu0 0.0
    %568 = vmatprep.subr.mxu0 0.0
    %569 = vmatpush1.msra.mxu0 0.0
    %570 = vmatprep.subr.mxu0 0.0
    %571 = vmatpush1.msra.mxu0 0.0
    %572 = vmatprep.subr.mxu0 0.0
    %573 = vmatpush1.msra.mxu0 0.0
    %574 = vmatprep.subr.mxu0 0.0
    %575 = vmatpush1.msra.mxu0 0.0
    %576 = vmatprep.subr.mxu0 0.0
    %577 = vmatpush1.msra.mxu0 0.0
    %578 = vmatprep.subr.mxu0 0.0
    %579 = vmatpush1.msra.mxu0 0.0
    %580 = vmatprep.subr.mxu0 0.0
    %581 = vmatpush1.msra.mxu0 0.0
    %582 = vmatprep.subr.mxu0 0.0
    %583 = vmatpush1.msra.mxu0 0.0
    %584 = vmatprep.subr.mxu0 0.0
    %585 = vmatpush1.msra.mxu0 0.0
    %586 = vmatprep.subr.mxu0 0.0
    %587 = vmatpush1.msra.mxu0 0.0
    %588 = vmatprep.subr.mxu0 0.0
    %589 = vmatpush1.msra.mxu0 0.0
    %590 = vmatprep.subr.mxu0 0.0
    %591 = vmatpush1.msra.mxu0 0.0
    %592 = vmatprep.subr.mxu0 0.0
    %593 = vmatpush1.msra.mxu0 0.0
    %594 = vmatprep.subr.mxu0 0.0
    %595 = vmatpush1.msra.mxu0 0.0
    %596 = vmatprep.subr.mxu0 0.0
    %597 = vmatpush1.msra.mxu0 0.0
    %598 = vmatprep.subr.mxu0 0.0
    %599 = vmatpush1.msra.mxu0 0.0
    %600 = vmatprep.subr.mxu0 0.0
    %601 = vmatpush1.msra.mxu0 0.0
    %602 = vmatprep.subr.mxu0 0.0
    %603 = vmatpush1.msra.mxu0 0.0
    %604 = vmatprep.subr.mxu0 0.0
    %605 = vmatpush1.msra.mxu0 0.0
    %606 = vmatprep.subr.mxu0 0.0
    %607 = vmatpush1.msra.mxu0 0.0
    %608 = vmatprep.subr.mxu0 0.0
    %609 = vmatpush1.msra.mxu0 0.0
    %610 = vmatprep.subr.mxu0 0.0
    %611 = vmatpush1.msra.mxu0 0.0
    %612 = vmatprep.subr.mxu0 0.0
    %613 = vmatpush1.msra.mxu0 0.0
    %614 = vmatprep.mubr.f32.mxu0 0.0
    %615 = vmatmul.mubr.f32.gmra.mrb[0].mxu0 %v548
    %v616 = vpop.f32.mrb[0].mxu0
    %v617 = vadd.f32 0.0, %v616
    %v618 = vpop.f32.mrb[0].mxu0
    %619 = vdwg.mxu0
    %v620 = vadd.f32 %v541, %v617
    %621 = vset.pattern.permute.xlu0 24
    %622 = vperm.xlu0 %621, %v542
    %v623 = vpop.permute.xlu0 %622
    %625 = vset.pattern.permute.xlu0 25
    %626 = vperm.xlu0 %625, %v542
    %v627 = vpop.permute.xlu0 %626
    %629 = vset.pattern.permute.xlu0 26
    %630 = vperm.xlu0 %629, %v542
    %v631 = vpop.permute.xlu0 %630
    %633 = vset.pattern.permute.xlu0 27
    %634 = vperm.xlu0 %633, %v542
    %v635 = vpop.permute.xlu0 %634
    %637 = vset.pattern.permute.xlu0 28
    %638 = vperm.xlu0 %637, %v542
    %v639 = vpop.permute.xlu0 %638
    %641 = vset.pattern.permute.xlu0 29
    %642 = vperm.xlu0 %641, %v542
    %v643 = vpop.permute.xlu0 %642
    %645 = vset.pattern.permute.xlu0 30
    %646 = vperm.xlu0 %645, %v542
    %v647 = vpop.permute.xlu0 %646
    %v649 = vmax.f32 %v620, 0.0
    %v650 = vlaneseq
    %v651 = vshrl.u32 %v650, 7
    %v652 = vsub.s32 0, %v651
    %v653 = vrot.slane %v649, %v652
    %v654 = vmul.f32 %v623, %v653
    %v655 = vadd.f32 %v620, %v654
    %v656 = vmax.f32 %v655, 0.0
    %v657 = vlaneseq
    %v658 = vshrl.u32 %v657, 7
    %v659 = vsub.s32 1, %v658
    %v660 = vrot.slane %v656, %v659
    %v661 = vmul.f32 %v627, %v660
    %v662 = vadd.f32 %v655, %v661
    %v663 = vmax.f32 %v662, 0.0
    %v664 = vlaneseq
    %v665 = vshrl.u32 %v664, 7
    %v666 = vsub.s32 2, %v665
    %v667 = vrot.slane %v663, %v666
    %v668 = vmul.f32 %v631, %v667
    %v669 = vadd.f32 %v662, %v668
    %v670 = vmax.f32 %v669, 0.0
    %v671 = vlaneseq
    %v672 = vshrl.u32 %v671, 7
    %v673 = vsub.s32 3, %v672
    %v674 = vrot.slane %v670, %v673
    %v675 = vmul.f32 %v635, %v674
    %v676 = vadd.f32 %v669, %v675
    %v677 = vmax.f32 %v676, 0.0
    %v678 = vlaneseq
    %v679 = vshrl.u32 %v678, 7
    %v680 = vsub.s32 4, %v679
    %v681 = vrot.slane %v677, %v680
    %v682 = vmul.f32 %v639, %v681
    %v683 = vadd.f32 %v676, %v682
    %v684 = vmax.f32 %v683, 0.0
    %v685 = vlaneseq
    %v686 = vshrl.u32 %v685, 7
    %v687 = vsub.s32 5, %v686
    %v688 = vrot.slane %v684, %v687
    %v689 = vmul.f32 %v643, %v688
    %v690 = vadd.f32 %v683, %v689
    %v691 = vmax.f32 %v690, 0.0
    %v692 = vlaneseq
    %v693 = vshrl.u32 %v692, 7
    %v694 = vsub.s32 6, %v693
    %v695 = vrot.slane %v691, %v694
    %v696 = vmul.f32 %v647, %v695
    %v697 = vadd.f32 %v690, %v696
    %v698 = vmax.f32 %v697, 0.0
    %699 = vst [vmem:[#allocation3 + $0x18] sm:$0xff] %v698
    %v700 = vld [vmem:[%s4] sm:$0xff]
    %v701 = vld [vmem:[#allocation3] sm:$0xff]
    %v702 = vld [vmem:[#allocation3 + $0x8] sm:$0xff]
    %v703 = vld [vmem:[#allocation3 + $0x10] sm:$0xff]
    %v704 = vld [vmem:[#allocation3 + $0x18] sm:$0xff]
    %v705 = vld [vmem:[#allocation3 + $0x20] sm:$0xff]
    %v706 = vld [vmem:[#allocation3 + $0x28] sm:$0xff]
    %vm707 = vcmask 392192
    %v709 = vsel %vm707, %v700, 0
    %711 = vmatprep.subr.mxu0 0.0
    %712 = vmatpush1.msra.mxu0 %v701
    %713 = vmatprep.subr.mxu0 0.0
    %714 = vmatpush1.msra.mxu0 %v702
    %715 = vmatprep.subr.mxu0 0.0
    %716 = vmatpush1.msra.mxu0 %v703
    %717 = vmatprep.subr.mxu0 0.0
    %718 = vmatpush1.msra.mxu0 %v704
    %719 = vmatprep.subr.mxu0 0.0
    %720 = vmatpush1.msra.mxu0 %v705
    %721 = vmatprep.subr.mxu0 0.0
    %722 = vmatpush1.msra.mxu0 %v706
    %723 = vmatprep.subr.mxu0 0.0
    %724 = vmatpush1.msra.mxu0 0.0
    %725 = vmatprep.subr.mxu0 0.0
    %726 = vmatpush1.msra.mxu0 0.0
    %727 = vmatprep.subr.mxu0 0.0
    %728 = vmatpush1.msra.mxu0 0.0
    %729 = vmatprep.subr.mxu0 0.0
    %730 = vmatpush1.msra.mxu0 0.0
    %731 = vmatprep.subr.mxu0 0.0
    %732 = vmatpush1.msra.mxu0 0.0
    %733 = vmatprep.subr.mxu0 0.0
    %734 = vmatpush1.msra.mxu0 0.0
    %735 = vmatprep.subr.mxu0 0.0
    %736 = vmatpush1.msra.mxu0 0.0
    %737 = vmatprep.subr.mxu0 0.0
    %738 = vmatpush1.msra.mxu0 0.0
    %739 = vmatprep.subr.mxu0 0.0
    %740 = vmatpush1.msra.mxu0 0.0
    %741 = vmatprep.subr.mxu0 0.0
    %742 = vmatpush1.msra.mxu0 0.0
    %743 = vmatprep.subr.mxu0 0.0
    %744 = vmatpush1.msra.mxu0 0.0
    %745 = vmatprep.subr.mxu0 0.0
    %746 = vmatpush1.msra.mxu0 0.0
    %747 = vmatprep.subr.mxu0 0.0
    %748 = vmatpush1.msra.mxu0 0.0
    %749 = vmatprep.subr.mxu0 0.0
    %750 = vmatpush1.msra.mxu0 0.0
    %751 = vmatprep.subr.mxu0 0.0
    %752 = vmatpush1.msra.mxu0 0.0
    %753 = vmatprep.subr.mxu0 0.0
    %754 = vmatpush1.msra.mxu0 0.0
    %755 = vmatprep.subr.mxu0 0.0
    %756 = vmatpush1.msra.mxu0 0.0
    %757 = vmatprep.subr.mxu0 0.0
    %758 = vmatpush1.msra.mxu0 0.0
    %759 = vmatprep.subr.mxu0 0.0
    %760 = vmatpush1.msra.mxu0 0.0
    %761 = vmatprep.subr.mxu0 0.0
    %762 = vmatpush1.msra.mxu0 0.0
    %763 = vmatprep.subr.mxu0 0.0
    %764 = vmatpush1.msra.mxu0 0.0
    %765 = vmatprep.subr.mxu0 0.0
    %766 = vmatpush1.msra.mxu0 0.0
    %767 = vmatprep.subr.mxu0 0.0
    %768 = vmatpush1.msra.mxu0 0.0
    %769 = vmatprep.subr.mxu0 0.0
    %770 = vmatpush1.msra.mxu0 0.0
    %771 = vmatprep.subr.mxu0 0.0
    %772 = vmatpush1.msra.mxu0 0.0
    %773 = vmatprep.subr.mxu0 0.0
    %774 = vmatpush1.msra.mxu0 0.0
    %775 = vmatprep.mubr.f32.mxu0 0.0
    %776 = vmatmul.mubr.f32.gmra.mrb[0].mxu0 %v709
    %v777 = vpop.f32.mrb[0].mxu0
    %v778 = vadd.f32 0.0, %v777
    %v779 = vpop.f32.mrb[0].mxu0
    %780 = vdwg.mxu0
    %781 = vst [vmem:[#allocation7] sm:$0xff] %v778
    // Predicated region
    $region26: #{tpu_custom_call.1} parent=1 // pred_check
      _
    $region27: #{tpu_custom_call.1} parent=1 // pred_check_branch
      %783 = sbr.rel (0) target = $region29
    $region28: #{tpu_custom_call.1} parent=1 // pred_region
      %s785 = ssub.s32 128, 128
      %786 = vsyncadd [#allocation6], %s785
      %s788 = sshll.u32 [#allocation7], 4
      %s789 = int_to_ptr.vmem [resolvable:$true] %s788
      %791 = dma.vmem_to_hbm [thread:$0]  %s789, 128, %s5, [#allocation6]
    $region29: #{tpu_custom_call.1} parent=1 // pred_fallthru
      _
    // Predicated region
    $region30: #{tpu_custom_call.1} parent=1 // pred_check
      _
    $region31: #{tpu_custom_call.1} parent=1 // pred_check_branch
      %793 = sbr.rel (0) target = $region33
    $region32: #{tpu_custom_call.1} parent=1 // pred_region
      %794 = dma.done [#allocation6], 128
    $region33: #{tpu_custom_call.1} parent=1 // pred_fallthru
      _
    %795 = vsyncpa [#allocation5], 1
    %796 = vsyncpa [#allocation6], 1

</llo_original>
